<compile_context>
chip_gen: v5e
topology: v5e:2x2
jax: 0.10.0
libtpu: 0.0.40
codegen_flags: <defaults>
</compile_context>

<pallas_src>
import jax
import jax.numpy as jnp
from jax.experimental import pallas as pl
from jax.experimental.pallas import tpu as pltpu


_LANE = 128  # lane width / minimum MXU-friendly padding


def _round_up(x, m):
    return ((x + m - 1) // m) * m


# ---------------------------------------------------------------------------
# Kernel body helpers (traced inside the pallas_call body)
# ---------------------------------------------------------------------------
def _relu(x):
    return jnp.maximum(x, 0.0)


def _linear(x, w_ref, b_ref):
    """x @ W + b with bf16 MXU inputs and f32 accumulation (bias kept in f32)."""
    acc = jnp.dot(x.astype(w_ref.dtype), w_ref[...],
                  preferred_element_type=jnp.float32)
    return acc + b_ref[...]


def _state_net_both(x2_ref, sw1, sb1, sw2, sb2, sw3, sb3):
    """Run state_net ONCE on [state ; next_state] stacked along the leading dim.

    x2_ref block is (2, bb, obs_dim); merging the leading dim into the sublane dim
    is layout-free when bb is a multiple of 8 (no sublane concat / VMEM copy).
    """
    x2 = x2_ref[...]
    two, bb, obs = x2.shape
    x = x2.reshape(two * bb, obs)
    h = _relu(_linear(x, sw1, sb1))
    h = _relu(_linear(h, sw2, sb2))
    sn = _linear(h, sw3, sb3)                    # (2*bb, skill_pad) f32
    sn = sn.reshape(two, bb, sn.shape[-1])       # free leading-dim split
    return sn[0], sn[1]


def _pred_net(s, ns, pw1a, pw1b, pb1, pw2, pb2, pw3, pb3):
    """pred_net(cat([s, ns], 1)) without materializing the concat: the first-layer
    weight is pre-split so two matmuls accumulate into one f32 result."""
    h = (jnp.dot(s.astype(pw1a.dtype), pw1a[...], preferred_element_type=jnp.float32)
         + jnp.dot(ns.astype(pw1b.dtype), pw1b[...], preferred_element_type=jnp.float32)
         + pb1[...])
    h = _relu(h)
    h = _relu(_linear(h, pw2, pb2))
    return _linear(h, pw3, pb3)


def _cic_fused_kernel(
    # batch-tiled activations
    x2_ref, skill_ref,
    # state_net params (shared by state and next_state, as in the reference)
    sw1, sb1, sw2, sb2, sw3, sb3,
    # skill_net params
    kw1, kb1, kw2, kb2, kw3, kb3,
    # pred_net params (first-layer weight pre-split)
    pw1a, pw1b, pb1, pw2, pb2, pw3, pb3,
    # lane-dense padded outputs
    q_ref, k_ref,
):
    s, ns = _state_net_both(x2_ref, sw1, sb1, sw2, sb2, sw3, sb3)

    # skill_net(skill) -> query (padded to 128 lanes -> unmasked stores)
    h = _relu(_linear(skill_ref[...], kw1, kb1))
    h = _relu(_linear(h, kw2, kb2))
    q_ref[...] = _linear(h, kw3, kb3).astype(q_ref.dtype)

    # pred_net([s, ns]) -> key
    k_ref[...] = _pred_net(s, ns, pw1a, pw1b, pb1,
                           pw2, pb2, pw3, pb3).astype(k_ref.dtype)


def _cic_key_only_kernel(
    x2_ref,
    sw1, sb1, sw2, sb2, sw3, sb3,
    pw1a, pw1b, pb1, pw2, pb2, pw3, pb3,
    k_ref,
):
    """project_skill=False variant: skill_net is Identity, only key is computed."""
    s, ns = _state_net_both(x2_ref, sw1, sb1, sw2, sb2, sw3, sb3)
    k_ref[...] = _pred_net(s, ns, pw1a, pw1b, pb1,
                           pw2, pb2, pw3, pb3).astype(k_ref.dtype)


# ---------------------------------------------------------------------------
# Parameter init: PyTorch nn.Linear-like, stored transposed (in, out) in bf16,
# zero-padded to lane-dense shapes.  Padding rows/cols are exactly zero, so the
# padded network is numerically identical to the unpadded one on the logical slice.
# ---------------------------------------------------------------------------
def _init_linear(key, d_in, d_out, d_in_pad, d_out_pad, weight_dtype):
    kw, kb = jax.random.split(key)
    bound = 1.0 / (d_in ** 0.5)
    w = jax.random.uniform(kw, (d_in, d_out), jnp.float32, -bound, bound)
    b = jax.random.uniform(kb, (1, d_out), jnp.float32, -bound, bound)
    w_pad = jnp.zeros((d_in_pad, d_out_pad), weight_dtype)
    w_pad = w_pad.at[:d_in, :d_out].set(w.astype(weight_dtype))
    b_pad = jnp.zeros((1, d_out_pad), jnp.float32)
    b_pad = b_pad.at[:, :d_out].set(b)
    return w_pad, b_pad


class CICPallas:
    """JAX/Pallas port of the PyTorch CIC module (single fused-kernel forward)."""

    def __init__(self, obs_dim, skill_dim, hidden_dim, project_skill, key, *,
                 block_b=512, weight_dtype=jnp.bfloat16, pad_multiple=_LANE,
                 vmem_limit_bytes=None, single_buffer_weights=True):
        self.obs_dim = obs_dim
        self.skill_dim = skill_dim
        self.hidden_dim = hidden_dim
        self.project_skill = project_skill
        # block_b tuning: v5e/v6e -> as large as VMEM allows (single TensorCore);
        # v7x -> <= ceil(B/2) rounded to 8 so the parallel batch axis has >=2 steps.
        self.block_b = block_b
        self.vmem_limit_bytes = vmem_limit_bytes       # set explicitly on v5e at scale
        self._single_buffer_weights = single_buffer_weights

        self.hidden_pad = _round_up(hidden_dim, pad_multiple)
        self.skill_pad = _round_up(skill_dim, pad_multiple)
        H, P = self.hidden_pad, self.skill_pad

        # TODO(synk): utils.weight_init from the reference is undefined in the spec;
        # PyTorch-default nn.Linear uniform init is used instead.
        k_state, k_pred, k_skill = jax.random.split(key, 3)

        # state_net (the reference forward applies it to BOTH state and next_state).
        ks = jax.random.split(k_state, 3)
        self.state_net = (
            *_init_linear(ks[0], obs_dim, hidden_dim, obs_dim, H, weight_dtype),
            *_init_linear(ks[1], hidden_dim, hidden_dim, H, H, weight_dtype),
            *_init_linear(ks[2], hidden_dim, skill_dim, H, P, weight_dtype),
        )
        # NOTE: the reference also builds next_state_net but never uses it in
        # forward; we do not allocate it (pure parameter-memory saving).

        # pred_net: first-layer weight pre-split into the s / ns halves so the
        # kernel never materializes cat([s, ns], 1).
        kp = jax.random.split(k_pred, 3)
        kw, kb = jax.random.split(kp[0])
        bound = 1.0 / ((2 * skill_dim) ** 0.5)
        w1 = jax.random.uniform(kw, (2 * skill_dim, hidden_dim), jnp.float32,
                                -bound, bound)
        b1 = jax.random.uniform(kb, (1, hidden_dim), jnp.float32, -bound, bound)
        pw1a = jnp.zeros((P, H), weight_dtype).at[:skill_dim, :hidden_dim].set(
            w1[:skill_dim].astype(weight_dtype))
        pw1b = jnp.zeros((P, H), weight_dtype).at[:skill_dim, :hidden_dim].set(
            w1[skill_dim:].astype(weight_dtype))
        pb1 = jnp.zeros((1, H), jnp.float32).at[:, :hidden_dim].set(b1)
        self.pred_net = (
            pw1a, pw1b, pb1,
            *_init_linear(kp[1], hidden_dim, hidden_dim, H, H, weight_dtype),
            *_init_linear(kp[2], hidden_dim, skill_dim, H, P, weight_dtype),
        )

        if project_skill:
            kk = jax.random.split(k_skill, 3)
            self.skill_net = (
                *_init_linear(kk[0], skill_dim, hidden_dim, skill_dim, H, weight_dtype),
                *_init_linear(kk[1], hidden_dim, hidden_dim, H, H, weight_dtype),
                *_init_linear(kk[2], hidden_dim, skill_dim, H, P, weight_dtype),
            )
        else:
            self.skill_net = None   # nn.Identity()

    # ------------------------------------------------------------------ utils
    def _pick_block(self, B):
        if B <= self.block_b:
            return B                               # one full block (always legal)
        return max(8, (self.block_b // 8) * 8)     # 8-aligned sublane tiles

    def _build_and_call(self, x2, skill, B, bb, single_buffer_weights):
        grid = (pl.cdiv(B, bb),)
        P = self.skill_pad
        H = self.hidden_pad
        obs_dim = x2.shape[-1]

        def wspec(w):
            # Weights never change across grid steps (constant index_map); skip
            # double-buffering them when the jax version supports Buffered(1).
            if single_buffer_weights:
                return pl.BlockSpec(w.shape, lambda i: (0, 0),
                                    pipeline_mode=pl.Buffered(buffer_count=1))
            return pl.BlockSpec(w.shape, lambda i: (0, 0))

        x2_spec = pl.BlockSpec((2, bb, obs_dim), lambda i: (0, i, 0))
        out_spec = pl.BlockSpec((bb, P), lambda i: (i, 0))
        out_sds = jax.ShapeDtypeStruct((B, P), jnp.float32)

        if self.project_skill:
            weights = (*self.state_net, *self.skill_net, *self.pred_net)
            kernel = _cic_fused_kernel
            in_specs = ([x2_spec,
                         pl.BlockSpec((bb, self.skill_dim), lambda i: (i, 0))]
                        + [wspec(w) for w in weights])
            args = (x2, skill, *weights)
            out_shape = (out_sds, out_sds)
            out_specs = (out_spec, out_spec)
        else:
            weights = (*self.state_net, *self.pred_net)
            kernel = _cic_key_only_kernel
            in_specs = [x2_spec] + [wspec(w) for w in weights]
            args = (x2, *weights)
            out_shape = out_sds
            out_specs = out_spec

        # Advisory cost estimate (helps XLA schedule around the custom call).
        flops = 2 * (2 * B) * (obs_dim * H + H * H + H * P)           # state_net x2
        flops += 2 * B * (2 * P * H + H * H + H * P)                  # pred_net
        if self.project_skill:
            flops += 2 * B * (self.skill_dim * H + H * H + H * P)     # skill_net
        weight_bytes = sum(int(w.size) * int(w.dtype.itemsize) for w in weights)
        act_bytes = int(x2.size) * int(x2.dtype.itemsize)
        if self.project_skill:
            act_bytes += int(skill.size) * int(skill.dtype.itemsize)
        out_bytes = (2 if self.project_skill else 1) * B * P * 4
        cost = pl.CostEstimate(flops=int(flops), transcendentals=0,
                               bytes_accessed=int(weight_bytes + act_bytes + out_bytes))

        cp_kwargs = dict(dimension_semantics=("parallel",))
        if self.vmem_limit_bytes is not None:
            cp_kwargs["vmem_limit_bytes"] = self.vmem_limit_bytes

        return pl.pallas_call(
            kernel,
            out_shape=out_shape,
            grid=grid,
            in_specs=in_specs,
            out_specs=out_specs,
            compiler_params=pltpu.CompilerParams(**cp_kwargs),
            cost_estimate=cost,
        )(*args)

    # ---------------------------------------------------------------- forward
    def forward(self, state, next_state, skill):
        assert state.ndim == next_state.ndim
        B = state.shape[0]
        bb = self._pick_block(B)

        # Wrapper-side stack on a leading dim of 2: one activation DMA stream and
        # no in-kernel sublane concat; state_net runs once at M = 2*bb.
        x2 = jnp.stack([state, next_state], axis=0)      # (2, B, obs_dim)

        try:
            outs = self._build_and_call(x2, skill, B, bb, self._single_buffer_weights)
        except Exception:
            if not self._single_buffer_weights:
                raise
            # pipeline_mode=pl.Buffered(1) not supported on this jax version;
            # retry with default (double-buffered) weight specs.
            self._single_buffer_weights = False
            outs = self._build_and_call(x2, skill, B, bb, False)

        if self.project_skill:
            q_pad, k_pad = outs
            query = q_pad[:, :self.skill_dim]
            key = k_pad[:, :self.skill_dim]
        else:
            query = skill                                 # nn.Identity()
            key = outs[:, :self.skill_dim]
        return query, key

    __call__ = forward


# ---------------------------------------------------------------------------
# Pure-JAX reference (same padded params, same bf16 rounding) for a sanity check.
# ---------------------------------------------------------------------------
def _reference_forward(model, state, next_state, skill):
    def lin(x, w, b):
        xb = x.astype(jnp.bfloat16).astype(jnp.float32)
        return xb @ w.astype(jnp.float32) + b

    def mlp(x, p):
        w1, b1, w2, b2, w3, b3 = p
        h = jnp.maximum(lin(x, w1, b1), 0.0)
        h = jnp.maximum(lin(h, w2, b2), 0.0)
        return lin(h, w3, b3)

    s = mlp(state, model.state_net)
    ns = mlp(next_state, model.state_net)
    pw1a, pw1b, pb1, pw2, pb2, pw3, pb3 = model.pred_net
    h = (s.astype(jnp.bfloat16).astype(jnp.float32) @ pw1a.astype(jnp.float32)
         + ns.astype(jnp.bfloat16).astype(jnp.float32) @ pw1b.astype(jnp.float32)
         + pb1)
    h = jnp.maximum(h, 0.0)
    h = jnp.maximum(lin(h, pw2, pb2), 0.0)
    key = lin(h, pw3, pb3)[:, :model.skill_dim]
    if model.project_skill:
        query = mlp(skill, model.skill_net)[:, :model.skill_dim]
    else:
        query = skill
    return query, key


if __name__ == "__main__":
    obs_dim, skill_dim, hidden_dim = 32, 16, 32
    batch = 8

    root = jax.random.PRNGKey(0)
    k_params, k_s, k_ns, k_sk = jax.random.split(root, 4)

    state = jax.random.normal(k_s, (batch, obs_dim), jnp.float32)
    next_state = jax.random.normal(k_ns, (batch, obs_dim), jnp.float32)
    skill = jax.random.normal(k_sk, (batch, skill_dim), jnp.float32)

    # project_skill=True path
    model = CICPallas(obs_dim, skill_dim, hidden_dim, project_skill=True, key=k_params)
    query, key = model.forward(state, next_state, skill)
    jax.block_until_ready((query, key))
    assert query.shape == (batch, skill_dim) and key.shape == (batch, skill_dim)
    assert bool(jnp.all(jnp.isfinite(query))) and bool(jnp.all(jnp.isfinite(key)))
    q_ref, k_ref = _reference_forward(model, state, next_state, skill)
    assert jnp.allclose(query, q_ref, atol=5e-2, rtol=5e-2)
    assert jnp.allclose(key, k_ref, atol=5e-2, rtol=5e-2)

    # project_skill=False path (skill_net = Identity)
    model2 = CICPallas(obs_dim, skill_dim, hidden_dim, project_skill=False, key=k_params)
    q2, k2 = model2.forward(state, next_state, skill)
    jax.block_until_ready((q2, k2))
    assert q2.shape == (batch, skill_dim) and k2.shape == (batch, skill_dim)
    q2_ref, k2_ref = _reference_forward(model2, state, next_state, skill)
    assert jnp.allclose(q2, q2_ref, atol=5e-2, rtol=5e-2)
    assert jnp.allclose(k2, k2_ref, atol=5e-2, rtol=5e-2)

    print("KERNEL_OK")
</pallas_src>

<mosaic_0001>
module attributes {stable_mosaic.version = 11 : i64} {
  func.func @_cic_fused_kernel(%arg0: i32, %arg1: memref<2x8x32xf32, #tpu.memory_space<vmem>>, %arg2: memref<8x16xf32, #tpu.memory_space<vmem>>, %arg3: memref<32x128xbf16, #tpu.memory_space<vmem>>, %arg4: memref<1x128xf32, #tpu.memory_space<vmem>>, %arg5: memref<128x128xbf16, #tpu.memory_space<vmem>>, %arg6: memref<1x128xf32, #tpu.memory_space<vmem>>, %arg7: memref<128x128xbf16, #tpu.memory_space<vmem>>, %arg8: memref<1x128xf32, #tpu.memory_space<vmem>>, %arg9: memref<16x128xbf16, #tpu.memory_space<vmem>>, %arg10: memref<1x128xf32, #tpu.memory_space<vmem>>, %arg11: memref<128x128xbf16, #tpu.memory_space<vmem>>, %arg12: memref<1x128xf32, #tpu.memory_space<vmem>>, %arg13: memref<128x128xbf16, #tpu.memory_space<vmem>>, %arg14: memref<1x128xf32, #tpu.memory_space<vmem>>, %arg15: memref<128x128xbf16, #tpu.memory_space<vmem>>, %arg16: memref<128x128xbf16, #tpu.memory_space<vmem>>, %arg17: memref<1x128xf32, #tpu.memory_space<vmem>>, %arg18: memref<128x128xbf16, #tpu.memory_space<vmem>>, %arg19: memref<1x128xf32, #tpu.memory_space<vmem>>, %arg20: memref<128x128xbf16, #tpu.memory_space<vmem>>, %arg21: memref<1x128xf32, #tpu.memory_space<vmem>>, %arg22: memref<8x128xf32, #tpu.memory_space<vmem>>, %arg23: memref<8x128xf32, #tpu.memory_space<vmem>>) attributes {dimension_semantics = [#tpu.dimension_semantics<parallel>], iteration_bounds = array<i64: 1>, scalar_prefetch = 0 : i64, scratch_operands = 0 : i64, tpu.core_type = #tpu.core_type<tc>, window_params = [{transform_indices = @transform_0, window_bounds = array<i64: 2, 8, 32>}, {transform_indices = @transform_1, window_bounds = array<i64: 8, 16>}, {pipeline_mode = #tpu.pipeline_mode<synchronous>, transform_indices = @transform_2, window_bounds = array<i64: 32, 128>}, {pipeline_mode = #tpu.pipeline_mode<synchronous>, transform_indices = @transform_3, window_bounds = array<i64: 1, 128>}, {pipeline_mode = #tpu.pipeline_mode<synchronous>, transform_indices = @transform_4, window_bounds = array<i64: 128, 128>}, {pipeline_mode = #tpu.pipeline_mode<synchronous>, transform_indices = @transform_5, window_bounds = array<i64: 1, 128>}, {pipeline_mode = #tpu.pipeline_mode<synchronous>, transform_indices = @transform_6, window_bounds = array<i64: 128, 128>}, {pipeline_mode = #tpu.pipeline_mode<synchronous>, transform_indices = @transform_7, window_bounds = array<i64: 1, 128>}, {pipeline_mode = #tpu.pipeline_mode<synchronous>, transform_indices = @transform_8, window_bounds = array<i64: 16, 128>}, {pipeline_mode = #tpu.pipeline_mode<synchronous>, transform_indices = @transform_9, window_bounds = array<i64: 1, 128>}, {pipeline_mode = #tpu.pipeline_mode<synchronous>, transform_indices = @transform_10, window_bounds = array<i64: 128, 128>}, {pipeline_mode = #tpu.pipeline_mode<synchronous>, transform_indices = @transform_11, window_bounds = array<i64: 1, 128>}, {pipeline_mode = #tpu.pipeline_mode<synchronous>, transform_indices = @transform_12, window_bounds = array<i64: 128, 128>}, {pipeline_mode = #tpu.pipeline_mode<synchronous>, transform_indices = @transform_13, window_bounds = array<i64: 1, 128>}, {pipeline_mode = #tpu.pipeline_mode<synchronous>, transform_indices = @transform_14, window_bounds = array<i64: 128, 128>}, {pipeline_mode = #tpu.pipeline_mode<synchronous>, transform_indices = @transform_15, window_bounds = array<i64: 128, 128>}, {pipeline_mode = #tpu.pipeline_mode<synchronous>, transform_indices = @transform_16, window_bounds = array<i64: 1, 128>}, {pipeline_mode = #tpu.pipeline_mode<synchronous>, transform_indices = @transform_17, window_bounds = array<i64: 128, 128>}, {pipeline_mode = #tpu.pipeline_mode<synchronous>, transform_indices = @transform_18, window_bounds = array<i64: 1, 128>}, {pipeline_mode = #tpu.pipeline_mode<synchronous>, transform_indices = @transform_19, window_bounds = array<i64: 128, 128>}, {pipeline_mode = #tpu.pipeline_mode<synchronous>, transform_indices = @transform_20, window_bounds = array<i64: 1, 128>}, {transform_indices = @transform_21, window_bounds = array<i64: 8, 128>}, {transform_indices = @transform_22, window_bounds = array<i64: 8, 128>}]} {
    %c0 = arith.constant 0 : index
    %c0_0 = arith.constant 0 : index
    %c0_1 = arith.constant 0 : index
    %0 = vector.load %arg1[%c0, %c0_0, %c0_1] : memref<2x8x32xf32, #tpu.memory_space<vmem>>, vector<2x8x32xf32>
    %1 = vector.shape_cast %0 : vector<2x8x32xf32> to vector<16x32xf32>
    %2 = arith.truncf %1 : vector<16x32xf32> to vector<16x32xbf16>
    %c0_2 = arith.constant 0 : index
    %c0_3 = arith.constant 0 : index
    %3 = vector.load %arg3[%c0_2, %c0_3] : memref<32x128xbf16, #tpu.memory_space<vmem>>, vector<32x128xbf16>
    %cst = arith.constant dense<0.000000e+00> : vector<16x128xf32>
    %4 = tpu.matmul %2, %3, %cst {dimension_numbers = #tpu.dot_dimension_numbers<[1], [0], [0], [1], [0, 0, 1, 1], [], []>} : vector<16x32xbf16>, vector<32x128xbf16>, vector<16x128xf32> -> vector<16x128xf32>
    %c0_4 = arith.constant 0 : index
    %c0_5 = arith.constant 0 : index
    %5 = vector.load %arg4[%c0_4, %c0_5] : memref<1x128xf32, #tpu.memory_space<vmem>>, vector<1x128xf32>
    %6 = vector.broadcast %5 : vector<1x128xf32> to vector<16x128xf32>
    %7 = arith.addf %4, %6 : vector<16x128xf32>
    %cst_6 = arith.constant 0.000000e+00 : f32
    %8 = vector.broadcast %cst_6 : f32 to vector<16x128xf32>
    %9 = arith.maximumf %7, %8 : vector<16x128xf32>
    %10 = arith.truncf %9 : vector<16x128xf32> to vector<16x128xbf16>
    %c0_7 = arith.constant 0 : index
    %c0_8 = arith.constant 0 : index
    %11 = vector.load %arg5[%c0_7, %c0_8] : memref<128x128xbf16, #tpu.memory_space<vmem>>, vector<128x128xbf16>
    %cst_9 = arith.constant dense<0.000000e+00> : vector<16x128xf32>
    %12 = tpu.matmul %10, %11, %cst_9 {dimension_numbers = #tpu.dot_dimension_numbers<[1], [0], [0], [1], [0, 0, 1, 1], [], []>} : vector<16x128xbf16>, vector<128x128xbf16>, vector<16x128xf32> -> vector<16x128xf32>
    %c0_10 = arith.constant 0 : index
    %c0_11 = arith.constant 0 : index
    %13 = vector.load %arg6[%c0_10, %c0_11] : memref<1x128xf32, #tpu.memory_space<vmem>>, vector<1x128xf32>
    %14 = vector.broadcast %13 : vector<1x128xf32> to vector<16x128xf32>
    %15 = arith.addf %12, %14 : vector<16x128xf32>
    %cst_12 = arith.constant 0.000000e+00 : f32
    %16 = vector.broadcast %cst_12 : f32 to vector<16x128xf32>
    %17 = arith.maximumf %15, %16 : vector<16x128xf32>
    %18 = arith.truncf %17 : vector<16x128xf32> to vector<16x128xbf16>
    %c0_13 = arith.constant 0 : index
    %c0_14 = arith.constant 0 : index
    %19 = vector.load %arg7[%c0_13, %c0_14] : memref<128x128xbf16, #tpu.memory_space<vmem>>, vector<128x128xbf16>
    %cst_15 = arith.constant dense<0.000000e+00> : vector<16x128xf32>
    %20 = tpu.matmul %18, %19, %cst_15 {dimension_numbers = #tpu.dot_dimension_numbers<[1], [0], [0], [1], [0, 0, 1, 1], [], []>} : vector<16x128xbf16>, vector<128x128xbf16>, vector<16x128xf32> -> vector<16x128xf32>
    %c0_16 = arith.constant 0 : index
    %c0_17 = arith.constant 0 : index
    %21 = vector.load %arg8[%c0_16, %c0_17] : memref<1x128xf32, #tpu.memory_space<vmem>>, vector<1x128xf32>
    %22 = vector.broadcast %21 : vector<1x128xf32> to vector<16x128xf32>
    %23 = arith.addf %20, %22 : vector<16x128xf32>
    %24 = vector.shape_cast %23 : vector<16x128xf32> to vector<2x8x128xf32>
    %25 = vector.extract_strided_slice %24 {offsets = [0, 0, 0], sizes = [1, 8, 128], strides = [1, 1, 1]} : vector<2x8x128xf32> to vector<1x8x128xf32>
    %26 = vector.shape_cast %25 : vector<1x8x128xf32> to vector<8x128xf32>
    %27 = vector.extract_strided_slice %24 {offsets = [1, 0, 0], sizes = [1, 8, 128], strides = [1, 1, 1]} : vector<2x8x128xf32> to vector<1x8x128xf32>
    %28 = vector.shape_cast %27 : vector<1x8x128xf32> to vector<8x128xf32>
    %c0_18 = arith.constant 0 : index
    %c0_19 = arith.constant 0 : index
    %29 = vector.load %arg2[%c0_18, %c0_19] : memref<8x16xf32, #tpu.memory_space<vmem>>, vector<8x16xf32>
    %30 = arith.truncf %29 : vector<8x16xf32> to vector<8x16xbf16>
    %c0_20 = arith.constant 0 : index
    %c0_21 = arith.constant 0 : index
    %31 = vector.load %arg9[%c0_20, %c0_21] : memref<16x128xbf16, #tpu.memory_space<vmem>>, vector<16x128xbf16>
    %cst_22 = arith.constant dense<0.000000e+00> : vector<8x128xf32>
    %32 = tpu.matmul %30, %31, %cst_22 {dimension_numbers = #tpu.dot_dimension_numbers<[1], [0], [0], [1], [0, 0, 1, 1], [], []>} : vector<8x16xbf16>, vector<16x128xbf16>, vector<8x128xf32> -> vector<8x128xf32>
    %c0_23 = arith.constant 0 : index
    %c0_24 = arith.constant 0 : index
    %33 = vector.load %arg10[%c0_23, %c0_24] : memref<1x128xf32, #tpu.memory_space<vmem>>, vector<1x128xf32>
    %34 = vector.broadcast %33 : vector<1x128xf32> to vector<8x128xf32>
    %35 = arith.addf %32, %34 : vector<8x128xf32>
    %cst_25 = arith.constant 0.000000e+00 : f32
    %36 = vector.broadcast %cst_25 : f32 to vector<8x128xf32>
    %37 = arith.maximumf %35, %36 : vector<8x128xf32>
    %38 = arith.truncf %37 : vector<8x128xf32> to vector<8x128xbf16>
    %c0_26 = arith.constant 0 : index
    %c0_27 = arith.constant 0 : index
    %39 = vector.load %arg11[%c0_26, %c0_27] : memref<128x128xbf16, #tpu.memory_space<vmem>>, vector<128x128xbf16>
    %cst_28 = arith.constant dense<0.000000e+00> : vector<8x128xf32>
    %40 = tpu.matmul %38, %39, %cst_28 {dimension_numbers = #tpu.dot_dimension_numbers<[1], [0], [0], [1], [0, 0, 1, 1], [], []>} : vector<8x128xbf16>, vector<128x128xbf16>, vector<8x128xf32> -> vector<8x128xf32>
    %c0_29 = arith.constant 0 : index
    %c0_30 = arith.constant 0 : index
    %41 = vector.load %arg12[%c0_29, %c0_30] : memref<1x128xf32, #tpu.memory_space<vmem>>, vector<1x128xf32>
    %42 = vector.broadcast %41 : vector<1x128xf32> to vector<8x128xf32>
    %43 = arith.addf %40, %42 : vector<8x128xf32>
    %cst_31 = arith.constant 0.000000e+00 : f32
    %44 = vector.broadcast %cst_31 : f32 to vector<8x128xf32>
    %45 = arith.maximumf %43, %44 : vector<8x128xf32>
    %46 = arith.truncf %45 : vector<8x128xf32> to vector<8x128xbf16>
    %c0_32 = arith.constant 0 : index
    %c0_33 = arith.constant 0 : index
    %47 = vector.load %arg13[%c0_32, %c0_33] : memref<128x128xbf16, #tpu.memory_space<vmem>>, vector<128x128xbf16>
    %cst_34 = arith.constant dense<0.000000e+00> : vector<8x128xf32>
    %48 = tpu.matmul %46, %47, %cst_34 {dimension_numbers = #tpu.dot_dimension_numbers<[1], [0], [0], [1], [0, 0, 1, 1], [], []>} : vector<8x128xbf16>, vector<128x128xbf16>, vector<8x128xf32> -> vector<8x128xf32>
    %c0_35 = arith.constant 0 : index
    %c0_36 = arith.constant 0 : index
    %49 = vector.load %arg14[%c0_35, %c0_36] : memref<1x128xf32, #tpu.memory_space<vmem>>, vector<1x128xf32>
    %50 = vector.broadcast %49 : vector<1x128xf32> to vector<8x128xf32>
    %51 = arith.addf %48, %50 : vector<8x128xf32>
    %c0_37 = arith.constant 0 : index
    %c0_38 = arith.constant 0 : index
    %52 = vector.load %arg22[%c0_37, %c0_38] : memref<8x128xf32, #tpu.memory_space<vmem>>, vector<8x128xf32>
    tpu.vector_store %arg22[%c0_37, %c0_38], %51 {strides = array<i32>} : memref<8x128xf32, #tpu.memory_space<vmem>>, vector<8x128xf32>,
    %53 = arith.truncf %26 : vector<8x128xf32> to vector<8x128xbf16>
    %c0_39 = arith.constant 0 : index
    %c0_40 = arith.constant 0 : index
    %54 = vector.load %arg15[%c0_39, %c0_40] : memref<128x128xbf16, #tpu.memory_space<vmem>>, vector<128x128xbf16>
    %cst_41 = arith.constant dense<0.000000e+00> : vector<8x128xf32>
    %55 = tpu.matmul %53, %54, %cst_41 {dimension_numbers = #tpu.dot_dimension_numbers<[1], [0], [0], [1], [0, 0, 1, 1], [], []>} : vector<8x128xbf16>, vector<128x128xbf16>, vector<8x128xf32> -> vector<8x128xf32>
    %56 = arith.truncf %28 : vector<8x128xf32> to vector<8x128xbf16>
    %c0_42 = arith.constant 0 : index
    %c0_43 = arith.constant 0 : index
    %57 = vector.load %arg16[%c0_42, %c0_43] : memref<128x128xbf16, #tpu.memory_space<vmem>>, vector<128x128xbf16>
    %cst_44 = arith.constant dense<0.000000e+00> : vector<8x128xf32>
    %58 = tpu.matmul %56, %57, %cst_44 {dimension_numbers = #tpu.dot_dimension_numbers<[1], [0], [0], [1], [0, 0, 1, 1], [], []>} : vector<8x128xbf16>, vector<128x128xbf16>, vector<8x128xf32> -> vector<8x128xf32>
    %59 = arith.addf %55, %58 : vector<8x128xf32>
    %c0_45 = arith.constant 0 : index
    %c0_46 = arith.constant 0 : index
    %60 = vector.load %arg17[%c0_45, %c0_46] : memref<1x128xf32, #tpu.memory_space<vmem>>, vector<1x128xf32>
    %61 = vector.broadcast %60 : vector<1x128xf32> to vector<8x128xf32>
    %62 = arith.addf %59, %61 : vector<8x128xf32>
    %cst_47 = arith.constant 0.000000e+00 : f32
    %63 = vector.broadcast %cst_47 : f32 to vector<8x128xf32>
    %64 = arith.maximumf %62, %63 : vector<8x128xf32>
    %65 = arith.truncf %64 : vector<8x128xf32> to vector<8x128xbf16>
    %c0_48 = arith.constant 0 : index
    %c0_49 = arith.constant 0 : index
    %66 = vector.load %arg18[%c0_48, %c0_49] : memref<128x128xbf16, #tpu.memory_space<vmem>>, vector<128x128xbf16>
    %cst_50 = arith.constant dense<0.000000e+00> : vector<8x128xf32>
    %67 = tpu.matmul %65, %66, %cst_50 {dimension_numbers = #tpu.dot_dimension_numbers<[1], [0], [0], [1], [0, 0, 1, 1], [], []>} : vector<8x128xbf16>, vector<128x128xbf16>, vector<8x128xf32> -> vector<8x128xf32>
    %c0_51 = arith.constant 0 : index
    %c0_52 = arith.constant 0 : index
    %68 = vector.load %arg19[%c0_51, %c0_52] : memref<1x128xf32, #tpu.memory_space<vmem>>, vector<1x128xf32>
    %69 = vector.broadcast %68 : vector<1x128xf32> to vector<8x128xf32>
    %70 = arith.addf %67, %69 : vector<8x128xf32>
    %cst_53 = arith.constant 0.000000e+00 : f32
    %71 = vector.broadcast %cst_53 : f32 to vector<8x128xf32>
    %72 = arith.maximumf %70, %71 : vector<8x128xf32>
    %73 = arith.truncf %72 : vector<8x128xf32> to vector<8x128xbf16>
    %c0_54 = arith.constant 0 : index
    %c0_55 = arith.constant 0 : index
    %74 = vector.load %arg20[%c0_54, %c0_55] : memref<128x128xbf16, #tpu.memory_space<vmem>>, vector<128x128xbf16>
    %cst_56 = arith.constant dense<0.000000e+00> : vector<8x128xf32>
    %75 = tpu.matmul %73, %74, %cst_56 {dimension_numbers = #tpu.dot_dimension_numbers<[1], [0], [0], [1], [0, 0, 1, 1], [], []>} : vector<8x128xbf16>, vector<128x128xbf16>, vector<8x128xf32> -> vector<8x128xf32>
    %c0_57 = arith.constant 0 : index
    %c0_58 = arith.constant 0 : index
    %76 = vector.load %arg21[%c0_57, %c0_58] : memref<1x128xf32, #tpu.memory_space<vmem>>, vector<1x128xf32>
    %77 = vector.broadcast %76 : vector<1x128xf32> to vector<8x128xf32>
    %78 = arith.addf %75, %77 : vector<8x128xf32>
    %c0_59 = arith.constant 0 : index
    %c0_60 = arith.constant 0 : index
    %79 = vector.load %arg23[%c0_59, %c0_60] : memref<8x128xf32, #tpu.memory_space<vmem>>, vector<8x128xf32>
    tpu.vector_store %arg23[%c0_59, %c0_60], %78 {strides = array<i32>} : memref<8x128xf32, #tpu.memory_space<vmem>>, vector<8x128xf32>,
    return
  }
  func.func @transform_0(%arg0: i32) -> (i32, i32, i32) {
    %c0_i32 = arith.constant 0 : i32
    %c0_i32_0 = arith.constant 0 : i32
    %c0_i32_1 = arith.constant 0 : i32
    return %c0_i32, %arg0, %c0_i32_0 : i32, i32, i32
  }
  func.func @transform_1(%arg0: i32) -> (i32, i32) {
    %c0_i32 = arith.constant 0 : i32
    %c0_i32_0 = arith.constant 0 : i32
    return %arg0, %c0_i32 : i32, i32
  }
  func.func @transform_2(%arg0: i32) -> (i32, i32) {
    %c0_i32 = arith.constant 0 : i32
    %c0_i32_0 = arith.constant 0 : i32
    %c0_i32_1 = arith.constant 0 : i32
    return %c0_i32, %c0_i32_0 : i32, i32
  }
  func.func @transform_3(%arg0: i32) -> (i32, i32) {
    %c0_i32 = arith.constant 0 : i32
    %c0_i32_0 = arith.constant 0 : i32
    %c0_i32_1 = arith.constant 0 : i32
    return %c0_i32, %c0_i32_0 : i32, i32
  }
  func.func @transform_4(%arg0: i32) -> (i32, i32) {
    %c0_i32 = arith.constant 0 : i32
    %c0_i32_0 = arith.constant 0 : i32
    %c0_i32_1 = arith.constant 0 : i32
    return %c0_i32, %c0_i32_0 : i32, i32
  }
  func.func @transform_5(%arg0: i32) -> (i32, i32) {
    %c0_i32 = arith.constant 0 : i32
    %c0_i32_0 = arith.constant 0 : i32
    %c0_i32_1 = arith.constant 0 : i32
    return %c0_i32, %c0_i32_0 : i32, i32
  }
  func.func @transform_6(%arg0: i32) -> (i32, i32) {
    %c0_i32 = arith.constant 0 : i32
    %c0_i32_0 = arith.constant 0 : i32
    %c0_i32_1 = arith.constant 0 : i32
    return %c0_i32, %c0_i32_0 : i32, i32
  }
  func.func @transform_7(%arg0: i32) -> (i32, i32) {
    %c0_i32 = arith.constant 0 : i32
    %c0_i32_0 = arith.constant 0 : i32
    %c0_i32_1 = arith.constant 0 : i32
    return %c0_i32, %c0_i32_0 : i32, i32
  }
  func.func @transform_8(%arg0: i32) -> (i32, i32) {
    %c0_i32 = arith.constant 0 : i32
    %c0_i32_0 = arith.constant 0 : i32
    %c0_i32_1 = arith.constant 0 : i32
    return %c0_i32, %c0_i32_0 : i32, i32
  }
  func.func @transform_9(%arg0: i32) -> (i32, i32) {
    %c0_i32 = arith.constant 0 : i32
    %c0_i32_0 = arith.constant 0 : i32
    %c0_i32_1 = arith.constant 0 : i32
    return %c0_i32, %c0_i32_0 : i32, i32
  }
  func.func @transform_10(%arg0: i32) -> (i32, i32) {
    %c0_i32 = arith.constant 0 : i32
    %c0_i32_0 = arith.constant 0 : i32
    %c0_i32_1 = arith.constant 0 : i32
    return %c0_i32, %c0_i32_0 : i32, i32
  }
  func.func @transform_11(%arg0: i32) -> (i32, i32) {
    %c0_i32 = arith.constant 0 : i32
    %c0_i32_0 = arith.constant 0 : i32
    %c0_i32_1 = arith.constant 0 : i32
    return %c0_i32, %c0_i32_0 : i32, i32
  }
  func.func @transform_12(%arg0: i32) -> (i32, i32) {
    %c0_i32 = arith.constant 0 : i32
    %c0_i32_0 = arith.constant 0 : i32
    %c0_i32_1 = arith.constant 0 : i32
    return %c0_i32, %c0_i32_0 : i32, i32
  }
  func.func @transform_13(%arg0: i32) -> (i32, i32) {
    %c0_i32 = arith.constant 0 : i32
    %c0_i32_0 = arith.constant 0 : i32
    %c0_i32_1 = arith.constant 0 : i32
    return %c0_i32, %c0_i32_0 : i32, i32
  }
  func.func @transform_14(%arg0: i32) -> (i32, i32) {
    %c0_i32 = arith.constant 0 : i32
    %c0_i32_0 = arith.constant 0 : i32
    %c0_i32_1 = arith.constant 0 : i32
    return %c0_i32, %c0_i32_0 : i32, i32
  }
  func.func @transform_15(%arg0: i32) -> (i32, i32) {
    %c0_i32 = arith.constant 0 : i32
    %c0_i32_0 = arith.constant 0 : i32
    %c0_i32_1 = arith.constant 0 : i32
    return %c0_i32, %c0_i32_0 : i32, i32
  }
  func.func @transform_16(%arg0: i32) -> (i32, i32) {
    %c0_i32 = arith.constant 0 : i32
    %c0_i32_0 = arith.constant 0 : i32
    %c0_i32_1 = arith.constant 0 : i32
    return %c0_i32, %c0_i32_0 : i32, i32
  }
  func.func @transform_17(%arg0: i32) -> (i32, i32) {
    %c0_i32 = arith.constant 0 : i32
    %c0_i32_0 = arith.constant 0 : i32
    %c0_i32_1 = arith.constant 0 : i32
    return %c0_i32, %c0_i32_0 : i32, i32
  }
  func.func @transform_18(%arg0: i32) -> (i32, i32) {
    %c0_i32 = arith.constant 0 : i32
    %c0_i32_0 = arith.constant 0 : i32
    %c0_i32_1 = arith.constant 0 : i32
    return %c0_i32, %c0_i32_0 : i32, i32
  }
  func.func @transform_19(%arg0: i32) -> (i32, i32) {
    %c0_i32 = arith.constant 0 : i32
    %c0_i32_0 = arith.constant 0 : i32
    %c0_i32_1 = arith.constant 0 : i32
    return %c0_i32, %c0_i32_0 : i32, i32
  }
  func.func @transform_20(%arg0: i32) -> (i32, i32) {
    %c0_i32 = arith.constant 0 : i32
    %c0_i32_0 = arith.constant 0 : i32
    %c0_i32_1 = arith.constant 0 : i32
    return %c0_i32, %c0_i32_0 : i32, i32
  }
  func.func @transform_21(%arg0: i32) -> (i32, i32) {
    %c0_i32 = arith.constant 0 : i32
    %c0_i32_0 = arith.constant 0 : i32
    return %arg0, %c0_i32 : i32, i32
  }
  func.func @transform_22(%arg0: i32) -> (i32, i32) {
    %c0_i32 = arith.constant 0 : i32
    %c0_i32_0 = arith.constant 0 : i32
    return %arg0, %c0_i32 : i32, i32
  }
}

module attributes {stable_mosaic.version = 11 : i64} {
  func.func @_cic_fused_kernel(%arg0: i32, %arg1: memref<2x8x32xf32, #tpu.memory_space<vmem>>, %arg2: memref<8x16xf32, #tpu.memory_space<vmem>>, %arg3: memref<32x128xbf16, #tpu.memory_space<vmem>>, %arg4: memref<1x128xf32, #tpu.memory_space<vmem>>, %arg5: memref<128x128xbf16, #tpu.memory_space<vmem>>, %arg6: memref<1x128xf32, #tpu.memory_space<vmem>>, %arg7: memref<128x128xbf16, #tpu.memory_space<vmem>>, %arg8: memref<1x128xf32, #tpu.memory_space<vmem>>, %arg9: memref<16x128xbf16, #tpu.memory_space<vmem>>, %arg10: memref<1x128xf32, #tpu.memory_space<vmem>>, %arg11: memref<128x128xbf16, #tpu.memory_space<vmem>>, %arg12: memref<1x128xf32, #tpu.memory_space<vmem>>, %arg13: memref<128x128xbf16, #tpu.memory_space<vmem>>, %arg14: memref<1x128xf32, #tpu.memory_space<vmem>>, %arg15: memref<128x128xbf16, #tpu.memory_space<vmem>>, %arg16: memref<128x128xbf16, #tpu.memory_space<vmem>>, %arg17: memref<1x128xf32, #tpu.memory_space<vmem>>, %arg18: memref<128x128xbf16, #tpu.memory_space<vmem>>, %arg19: memref<1x128xf32, #tpu.memory_space<vmem>>, %arg20: memref<128x128xbf16, #tpu.memory_space<vmem>>, %arg21: memref<1x128xf32, #tpu.memory_space<vmem>>, %arg22: memref<8x128xf32, #tpu.memory_space<vmem>>, %arg23: memref<8x128xf32, #tpu.memory_space<vmem>>) attributes {dimension_semantics = [#tpu.dimension_semantics<parallel>], iteration_bounds = array<i64: 1>, scalar_prefetch = 0 : i64, scratch_operands = 0 : i64, tpu.core_type = #tpu.core_type<tc>, window_params = [{transform_indices = @transform_0, window_bounds = array<i64: 2, 8, 32>}, {transform_indices = @transform_1, window_bounds = array<i64: 8, 16>}, {pipeline_mode = #tpu.pipeline_mode<synchronous>, transform_indices = @transform_2, window_bounds = array<i64: 32, 128>}, {pipeline_mode = #tpu.pipeline_mode<synchronous>, transform_indices = @transform_3, window_bounds = array<i64: 1, 128>}, {pipeline_mode = #tpu.pipeline_mode<synchronous>, transform_indices = @transform_4, window_bounds = array<i64: 128, 128>}, {pipeline_mode = #tpu.pipeline_mode<synchronous>, transform_indices = @transform_5, window_bounds = array<i64: 1, 128>}, {pipeline_mode = #tpu.pipeline_mode<synchronous>, transform_indices = @transform_6, window_bounds = array<i64: 128, 128>}, {pipeline_mode = #tpu.pipeline_mode<synchronous>, transform_indices = @transform_7, window_bounds = array<i64: 1, 128>}, {pipeline_mode = #tpu.pipeline_mode<synchronous>, transform_indices = @transform_8, window_bounds = array<i64: 16, 128>}, {pipeline_mode = #tpu.pipeline_mode<synchronous>, transform_indices = @transform_9, window_bounds = array<i64: 1, 128>}, {pipeline_mode = #tpu.pipeline_mode<synchronous>, transform_indices = @transform_10, window_bounds = array<i64: 128, 128>}, {pipeline_mode = #tpu.pipeline_mode<synchronous>, transform_indices = @transform_11, window_bounds = array<i64: 1, 128>}, {pipeline_mode = #tpu.pipeline_mode<synchronous>, transform_indices = @transform_12, window_bounds = array<i64: 128, 128>}, {pipeline_mode = #tpu.pipeline_mode<synchronous>, transform_indices = @transform_13, window_bounds = array<i64: 1, 128>}, {pipeline_mode = #tpu.pipeline_mode<synchronous>, transform_indices = @transform_14, window_bounds = array<i64: 128, 128>}, {pipeline_mode = #tpu.pipeline_mode<synchronous>, transform_indices = @transform_15, window_bounds = array<i64: 128, 128>}, {pipeline_mode = #tpu.pipeline_mode<synchronous>, transform_indices = @transform_16, window_bounds = array<i64: 1, 128>}, {pipeline_mode = #tpu.pipeline_mode<synchronous>, transform_indices = @transform_17, window_bounds = array<i64: 128, 128>}, {pipeline_mode = #tpu.pipeline_mode<synchronous>, transform_indices = @transform_18, window_bounds = array<i64: 1, 128>}, {pipeline_mode = #tpu.pipeline_mode<synchronous>, transform_indices = @transform_19, window_bounds = array<i64: 128, 128>}, {pipeline_mode = #tpu.pipeline_mode<synchronous>, transform_indices = @transform_20, window_bounds = array<i64: 1, 128>}, {transform_indices = @transform_21, window_bounds = array<i64: 8, 128>}, {transform_indices = @transform_22, window_bounds = array<i64: 8, 128>}]} {
    %c0 = arith.constant 0 : index
    %c0_0 = arith.constant 0 : index
    %c0_1 = arith.constant 0 : index
    %0 = vector.load %arg1[%c0, %c0_0, %c0_1] : memref<2x8x32xf32, #tpu.memory_space<vmem>>, vector<2x8x32xf32>
    %1 = vector.shape_cast %0 : vector<2x8x32xf32> to vector<16x32xf32>
    %2 = arith.truncf %1 : vector<16x32xf32> to vector<16x32xbf16>
    %c0_2 = arith.constant 0 : index
    %c0_3 = arith.constant 0 : index
    %3 = vector.load %arg3[%c0_2, %c0_3] : memref<32x128xbf16, #tpu.memory_space<vmem>>, vector<32x128xbf16>
    %cst = arith.constant dense<0.000000e+00> : vector<16x128xf32>
    %4 = tpu.matmul %2, %3, %cst {dimension_numbers = #tpu.dot_dimension_numbers<[1], [0], [0], [1], [0, 0, 1, 1], [], []>} : vector<16x32xbf16>, vector<32x128xbf16>, vector<16x128xf32> -> vector<16x128xf32>
    %c0_4 = arith.constant 0 : index
    %c0_5 = arith.constant 0 : index
    %5 = vector.load %arg4[%c0_4, %c0_5] : memref<1x128xf32, #tpu.memory_space<vmem>>, vector<1x128xf32>
    %6 = vector.broadcast %5 : vector<1x128xf32> to vector<16x128xf32>
    %7 = arith.addf %4, %6 : vector<16x128xf32>
    %cst_6 = arith.constant 0.000000e+00 : f32
    %8 = vector.broadcast %cst_6 : f32 to vector<16x128xf32>
    %9 = arith.maximumf %7, %8 : vector<16x128xf32>
    %10 = arith.truncf %9 : vector<16x128xf32> to vector<16x128xbf16>
    %c0_7 = arith.constant 0 : index
    %c0_8 = arith.constant 0 : index
    %11 = vector.load %arg5[%c0_7, %c0_8] : memref<128x128xbf16, #tpu.memory_space<vmem>>, vector<128x128xbf16>
    %cst_9 = arith.constant dense<0.000000e+00> : vector<16x128xf32>
    %12 = tpu.matmul %10, %11, %cst_9 {dimension_numbers = #tpu.dot_dimension_numbers<[1], [0], [0], [1], [0, 0, 1, 1], [], []>} : vector<16x128xbf16>, vector<128x128xbf16>, vector<16x128xf32> -> vector<16x128xf32>
    %c0_10 = arith.constant 0 : index
    %c0_11 = arith.constant 0 : index
    %13 = vector.load %arg6[%c0_10, %c0_11] : memref<1x128xf32, #tpu.memory_space<vmem>>, vector<1x128xf32>
    %14 = vector.broadcast %13 : vector<1x128xf32> to vector<16x128xf32>
    %15 = arith.addf %12, %14 : vector<16x128xf32>
    %cst_12 = arith.constant 0.000000e+00 : f32
    %16 = vector.broadcast %cst_12 : f32 to vector<16x128xf32>
    %17 = arith.maximumf %15, %16 : vector<16x128xf32>
    %18 = arith.truncf %17 : vector<16x128xf32> to vector<16x128xbf16>
    %c0_13 = arith.constant 0 : index
    %c0_14 = arith.constant 0 : index
    %19 = vector.load %arg7[%c0_13, %c0_14] : memref<128x128xbf16, #tpu.memory_space<vmem>>, vector<128x128xbf16>
    %cst_15 = arith.constant dense<0.000000e+00> : vector<16x128xf32>
    %20 = tpu.matmul %18, %19, %cst_15 {dimension_numbers = #tpu.dot_dimension_numbers<[1], [0], [0], [1], [0, 0, 1, 1], [], []>} : vector<16x128xbf16>, vector<128x128xbf16>, vector<16x128xf32> -> vector<16x128xf32>
    %c0_16 = arith.constant 0 : index
    %c0_17 = arith.constant 0 : index
    %21 = vector.load %arg8[%c0_16, %c0_17] : memref<1x128xf32, #tpu.memory_space<vmem>>, vector<1x128xf32>
    %22 = vector.broadcast %21 : vector<1x128xf32> to vector<16x128xf32>
    %23 = arith.addf %20, %22 : vector<16x128xf32>
    %24 = vector.shape_cast %23 : vector<16x128xf32> to vector<2x8x128xf32>
    %25 = vector.extract_strided_slice %24 {offsets = [0, 0, 0], sizes = [1, 8, 128], strides = [1, 1, 1]} : vector<2x8x128xf32> to vector<1x8x128xf32>
    %26 = vector.shape_cast %25 : vector<1x8x128xf32> to vector<8x128xf32>
    %27 = vector.extract_strided_slice %24 {offsets = [1, 0, 0], sizes = [1, 8, 128], strides = [1, 1, 1]} : vector<2x8x128xf32> to vector<1x8x128xf32>
    %28 = vector.shape_cast %27 : vector<1x8x128xf32> to vector<8x128xf32>
    %c0_18 = arith.constant 0 : index
    %c0_19 = arith.constant 0 : index
    %29 = vector.load %arg2[%c0_18, %c0_19] : memref<8x16xf32, #tpu.memory_space<vmem>>, vector<8x16xf32>
    %30 = arith.truncf %29 : vector<8x16xf32> to vector<8x16xbf16>
    %c0_20 = arith.constant 0 : index
    %c0_21 = arith.constant 0 : index
    %31 = vector.load %arg9[%c0_20, %c0_21] : memref<16x128xbf16, #tpu.memory_space<vmem>>, vector<16x128xbf16>
    %cst_22 = arith.constant dense<0.000000e+00> : vector<8x128xf32>
    %32 = tpu.matmul %30, %31, %cst_22 {dimension_numbers = #tpu.dot_dimension_numbers<[1], [0], [0], [1], [0, 0, 1, 1], [], []>} : vector<8x16xbf16>, vector<16x128xbf16>, vector<8x128xf32> -> vector<8x128xf32>
    %c0_23 = arith.constant 0 : index
    %c0_24 = arith.constant 0 : index
    %33 = vector.load %arg10[%c0_23, %c0_24] : memref<1x128xf32, #tpu.memory_space<vmem>>, vector<1x128xf32>
    %34 = vector.broadcast %33 : vector<1x128xf32> to vector<8x128xf32>
    %35 = arith.addf %32, %34 : vector<8x128xf32>
    %cst_25 = arith.constant 0.000000e+00 : f32
    %36 = vector.broadcast %cst_25 : f32 to vector<8x128xf32>
    %37 = arith.maximumf %35, %36 : vector<8x128xf32>
    %38 = arith.truncf %37 : vector<8x128xf32> to vector<8x128xbf16>
    %c0_26 = arith.constant 0 : index
    %c0_27 = arith.constant 0 : index
    %39 = vector.load %arg11[%c0_26, %c0_27] : memref<128x128xbf16, #tpu.memory_space<vmem>>, vector<128x128xbf16>
    %cst_28 = arith.constant dense<0.000000e+00> : vector<8x128xf32>
    %40 = tpu.matmul %38, %39, %cst_28 {dimension_numbers = #tpu.dot_dimension_numbers<[1], [0], [0], [1], [0, 0, 1, 1], [], []>} : vector<8x128xbf16>, vector<128x128xbf16>, vector<8x128xf32> -> vector<8x128xf32>
    %c0_29 = arith.constant 0 : index
    %c0_30 = arith.constant 0 : index
    %41 = vector.load %arg12[%c0_29, %c0_30] : memref<1x128xf32, #tpu.memory_space<vmem>>, vector<1x128xf32>
    %42 = vector.broadcast %41 : vector<1x128xf32> to vector<8x128xf32>
    %43 = arith.addf %40, %42 : vector<8x128xf32>
    %cst_31 = arith.constant 0.000000e+00 : f32
    %44 = vector.broadcast %cst_31 : f32 to vector<8x128xf32>
    %45 = arith.maximumf %43, %44 : vector<8x128xf32>
    %46 = arith.truncf %45 : vector<8x128xf32> to vector<8x128xbf16>
    %c0_32 = arith.constant 0 : index
    %c0_33 = arith.constant 0 : index
    %47 = vector.load %arg13[%c0_32, %c0_33] : memref<128x128xbf16, #tpu.memory_space<vmem>>, vector<128x128xbf16>
    %cst_34 = arith.constant dense<0.000000e+00> : vector<8x128xf32>
    %48 = tpu.matmul %46, %47, %cst_34 {dimension_numbers = #tpu.dot_dimension_numbers<[1], [0], [0], [1], [0, 0, 1, 1], [], []>} : vector<8x128xbf16>, vector<128x128xbf16>, vector<8x128xf32> -> vector<8x128xf32>
    %c0_35 = arith.constant 0 : index
    %c0_36 = arith.constant 0 : index
    %49 = vector.load %arg14[%c0_35, %c0_36] : memref<1x128xf32, #tpu.memory_space<vmem>>, vector<1x128xf32>
    %50 = vector.broadcast %49 : vector<1x128xf32> to vector<8x128xf32>
    %51 = arith.addf %48, %50 : vector<8x128xf32>
    %c0_37 = arith.constant 0 : index
    %c0_38 = arith.constant 0 : index
    %52 = vector.load %arg22[%c0_37, %c0_38] : memref<8x128xf32, #tpu.memory_space<vmem>>, vector<8x128xf32>
    tpu.vector_store %arg22[%c0_37, %c0_38], %51 {strides = array<i32>} : memref<8x128xf32, #tpu.memory_space<vmem>>, vector<8x128xf32>,
    %53 = arith.truncf %26 : vector<8x128xf32> to vector<8x128xbf16>
    %c0_39 = arith.constant 0 : index
    %c0_40 = arith.constant 0 : index
    %54 = vector.load %arg15[%c0_39, %c0_40] : memref<128x128xbf16, #tpu.memory_space<vmem>>, vector<128x128xbf16>
    %cst_41 = arith.constant dense<0.000000e+00> : vector<8x128xf32>
    %55 = tpu.matmul %53, %54, %cst_41 {dimension_numbers = #tpu.dot_dimension_numbers<[1], [0], [0], [1], [0, 0, 1, 1], [], []>} : vector<8x128xbf16>, vector<128x128xbf16>, vector<8x128xf32> -> vector<8x128xf32>
    %56 = arith.truncf %28 : vector<8x128xf32> to vector<8x128xbf16>
    %c0_42 = arith.constant 0 : index
    %c0_43 = arith.constant 0 : index
    %57 = vector.load %arg16[%c0_42, %c0_43] : memref<128x128xbf16, #tpu.memory_space<vmem>>, vector<128x128xbf16>
    %cst_44 = arith.constant dense<0.000000e+00> : vector<8x128xf32>
    %58 = tpu.matmul %56, %57, %cst_44 {dimension_numbers = #tpu.dot_dimension_numbers<[1], [0], [0], [1], [0, 0, 1, 1], [], []>} : vector<8x128xbf16>, vector<128x128xbf16>, vector<8x128xf32> -> vector<8x128xf32>
    %59 = arith.addf %55, %58 : vector<8x128xf32>
    %c0_45 = arith.constant 0 : index
    %c0_46 = arith.constant 0 : index
    %60 = vector.load %arg17[%c0_45, %c0_46] : memref<1x128xf32, #tpu.memory_space<vmem>>, vector<1x128xf32>
    %61 = vector.broadcast %60 : vector<1x128xf32> to vector<8x128xf32>
    %62 = arith.addf %59, %61 : vector<8x128xf32>
    %cst_47 = arith.constant 0.000000e+00 : f32
    %63 = vector.broadcast %cst_47 : f32 to vector<8x128xf32>
    %64 = arith.maximumf %62, %63 : vector<8x128xf32>
    %65 = arith.truncf %64 : vector<8x128xf32> to vector<8x128xbf16>
    %c0_48 = arith.constant 0 : index
    %c0_49 = arith.constant 0 : index
    %66 = vector.load %arg18[%c0_48, %c0_49] : memref<128x128xbf16, #tpu.memory_space<vmem>>, vector<128x128xbf16>
    %cst_50 = arith.constant dense<0.000000e+00> : vector<8x128xf32>
    %67 = tpu.matmul %65, %66, %cst_50 {dimension_numbers = #tpu.dot_dimension_numbers<[1], [0], [0], [1], [0, 0, 1, 1], [], []>} : vector<8x128xbf16>, vector<128x128xbf16>, vector<8x128xf32> -> vector<8x128xf32>
    %c0_51 = arith.constant 0 : index
    %c0_52 = arith.constant 0 : index
    %68 = vector.load %arg19[%c0_51, %c0_52] : memref<1x128xf32, #tpu.memory_space<vmem>>, vector<1x128xf32>
    %69 = vector.broadcast %68 : vector<1x128xf32> to vector<8x128xf32>
    %70 = arith.addf %67, %69 : vector<8x128xf32>
    %cst_53 = arith.constant 0.000000e+00 : f32
    %71 = vector.broadcast %cst_53 : f32 to vector<8x128xf32>
    %72 = arith.maximumf %70, %71 : vector<8x128xf32>
    %73 = arith.truncf %72 : vector<8x128xf32> to vector<8x128xbf16>
    %c0_54 = arith.constant 0 : index
    %c0_55 = arith.constant 0 : index
    %74 = vector.load %arg20[%c0_54, %c0_55] : memref<128x128xbf16, #tpu.memory_space<vmem>>, vector<128x128xbf16>
    %cst_56 = arith.constant dense<0.000000e+00> : vector<8x128xf32>
    %75 = tpu.matmul %73, %74, %cst_56 {dimension_numbers = #tpu.dot_dimension_numbers<[1], [0], [0], [1], [0, 0, 1, 1], [], []>} : vector<8x128xbf16>, vector<128x128xbf16>, vector<8x128xf32> -> vector<8x128xf32>
    %c0_57 = arith.constant 0 : index
    %c0_58 = arith.constant 0 : index
    %76 = vector.load %arg21[%c0_57, %c0_58] : memref<1x128xf32, #tpu.memory_space<vmem>>, vector<1x128xf32>
    %77 = vector.broadcast %76 : vector<1x128xf32> to vector<8x128xf32>
    %78 = arith.addf %75, %77 : vector<8x128xf32>
    %c0_59 = arith.constant 0 : index
    %c0_60 = arith.constant 0 : index
    %79 = vector.load %arg23[%c0_59, %c0_60] : memref<8x128xf32, #tpu.memory_space<vmem>>, vector<8x128xf32>
    tpu.vector_store %arg23[%c0_59, %c0_60], %78 {strides = array<i32>} : memref<8x128xf32, #tpu.memory_space<vmem>>, vector<8x128xf32>,
    return
  }
  func.func @transform_0(%arg0: i32) -> (i32, i32, i32) {
    %c0_i32 = arith.constant 0 : i32
    %c0_i32_0 = arith.constant 0 : i32
    %c0_i32_1 = arith.constant 0 : i32
    return %c0_i32, %arg0, %c0_i32_0 : i32, i32, i32
  }
  func.func @transform_1(%arg0: i32) -> (i32, i32) {
    %c0_i32 = arith.constant 0 : i32
    %c0_i32_0 = arith.constant 0 : i32
    return %arg0, %c0_i32 : i32, i32
  }
  func.func @transform_2(%arg0: i32) -> (i32, i32) {
    %c0_i32 = arith.constant 0 : i32
    %c0_i32_0 = arith.constant 0 : i32
    %c0_i32_1 = arith.constant 0 : i32
    return %c0_i32, %c0_i32_0 : i32, i32
  }
  func.func @transform_3(%arg0: i32) -> (i32, i32) {
    %c0_i32 = arith.constant 0 : i32
    %c0_i32_0 = arith.constant 0 : i32
    %c0_i32_1 = arith.constant 0 : i32
    return %c0_i32, %c0_i32_0 : i32, i32
  }
  func.func @transform_4(%arg0: i32) -> (i32, i32) {
    %c0_i32 = arith.constant 0 : i32
    %c0_i32_0 = arith.constant 0 : i32
    %c0_i32_1 = arith.constant 0 : i32
    return %c0_i32, %c0_i32_0 : i32, i32
  }
  func.func @transform_5(%arg0: i32) -> (i32, i32) {
    %c0_i32 = arith.constant 0 : i32
    %c0_i32_0 = arith.constant 0 : i32
    %c0_i32_1 = arith.constant 0 : i32
    return %c0_i32, %c0_i32_0 : i32, i32
  }
  func.func @transform_6(%arg0: i32) -> (i32, i32) {
    %c0_i32 = arith.constant 0 : i32
    %c0_i32_0 = arith.constant 0 : i32
    %c0_i32_1 = arith.constant 0 : i32
    return %c0_i32, %c0_i32_0 : i32, i32
  }
  func.func @transform_7(%arg0: i32) -> (i32, i32) {
    %c0_i32 = arith.constant 0 : i32
    %c0_i32_0 = arith.constant 0 : i32
    %c0_i32_1 = arith.constant 0 : i32
    return %c0_i32, %c0_i32_0 : i32, i32
  }
  func.func @transform_8(%arg0: i32) -> (i32, i32) {
    %c0_i32 = arith.constant 0 : i32
    %c0_i32_0 = arith.constant 0 : i32
    %c0_i32_1 = arith.constant 0 : i32
    return %c0_i32, %c0_i32_0 : i32, i32
  }
  func.func @transform_9(%arg0: i32) -> (i32, i32) {
    %c0_i32 = arith.constant 0 : i32
    %c0_i32_0 = arith.constant 0 : i32
    %c0_i32_1 = arith.constant 0 : i32
    return %c0_i32, %c0_i32_0 : i32, i32
  }
  func.func @transform_10(%arg0: i32) -> (i32, i32) {
    %c0_i32 = arith.constant 0 : i32
    %c0_i32_0 = arith.constant 0 : i32
    %c0_i32_1 = arith.constant 0 : i32
    return %c0_i32, %c0_i32_0 : i32, i32
  }
  func.func @transform_11(%arg0: i32) -> (i32, i32) {
    %c0_i32 = arith.constant 0 : i32
    %c0_i32_0 = arith.constant 0 : i32
    %c0_i32_1 = arith.constant 0 : i32
    return %c0_i32, %c0_i32_0 : i32, i32
  }
  func.func @transform_12(%arg0: i32) -> (i32, i32) {
    %c0_i32 = arith.constant 0 : i32
    %c0_i32_0 = arith.constant 0 : i32
    %c0_i32_1 = arith.constant 0 : i32
    return %c0_i32, %c0_i32_0 : i32, i32
  }
  func.func @transform_13(%arg0: i32) -> (i32, i32) {
    %c0_i32 = arith.constant 0 : i32
    %c0_i32_0 = arith.constant 0 : i32
    %c0_i32_1 = arith.constant 0 : i32
    return %c0_i32, %c0_i32_0 : i32, i32
  }
  func.func @transform_14(%arg0: i32) -> (i32, i32) {
    %c0_i32 = arith.constant 0 : i32
    %c0_i32_0 = arith.constant 0 : i32
    %c0_i32_1 = arith.constant 0 : i32
    return %c0_i32, %c0_i32_0 : i32, i32
  }
  func.func @transform_15(%arg0: i32) -> (i32, i32) {
    %c0_i32 = arith.constant 0 : i32
    %c0_i32_0 = arith.constant 0 : i32
    %c0_i32_1 = arith.constant 0 : i32
    return %c0_i32, %c0_i32_0 : i32, i32
  }
  func.func @transform_16(%arg0: i32) -> (i32, i32) {
    %c0_i32 = arith.constant 0 : i32
    %c0_i32_0 = arith.constant 0 : i32
    %c0_i32_1 = arith.constant 0 : i32
    return %c0_i32, %c0_i32_0 : i32, i32
  }
  func.func @transform_17(%arg0: i32) -> (i32, i32) {
    %c0_i32 = arith.constant 0 : i32
    %c0_i32_0 = arith.constant 0 : i32
    %c0_i32_1 = arith.constant 0 : i32
    return %c0_i32, %c0_i32_0 : i32, i32
  }
  func.func @transform_18(%arg0: i32) -> (i32, i32) {
    %c0_i32 = arith.constant 0 : i32
    %c0_i32_0 = arith.constant 0 : i32
    %c0_i32_1 = arith.constant 0 : i32
    return %c0_i32, %c0_i32_0 : i32, i32
  }
  func.func @transform_19(%arg0: i32) -> (i32, i32) {
    %c0_i32 = arith.constant 0 : i32
    %c0_i32_0 = arith.constant 0 : i32
    %c0_i32_1 = arith.constant 0 : i32
    return %c0_i32, %c0_i32_0 : i32, i32
  }
  func.func @transform_20(%arg0: i32) -> (i32, i32) {
    %c0_i32 = arith.constant 0 : i32
    %c0_i32_0 = arith.constant 0 : i32
    %c0_i32_1 = arith.constant 0 : i32
    return %c0_i32, %c0_i32_0 : i32, i32
  }
  func.func @transform_21(%arg0: i32) -> (i32, i32) {
    %c0_i32 = arith.constant 0 : i32
    %c0_i32_0 = arith.constant 0 : i32
    return %arg0, %c0_i32 : i32, i32
  }
  func.func @transform_22(%arg0: i32) -> (i32, i32) {
    %c0_i32 = arith.constant 0 : i32
    %c0_i32_0 = arith.constant 0 : i32
    return %arg0, %c0_i32 : i32, i32
  }
}

</mosaic_0001>

<llo_original>
// kernel: tpu_custom_call.1
$region0: #{tpu_custom_call.1}
  #allocation0 [shape = 'u32[]', space=smem, size = 0x4, offset = 0x4, fixed_abs, tag = 'smem constant byte address 0x4 - core index']
  #allocation1 [shape = 'u32[72,128]{1,0:T(1,128)}', space=vmem, size = 0x9000, scoped, tag = 'internal scratch']
  %s0 = inlined_call_operand.hbm [shape: f32[2,8,32], index: 0, kind: input, shape index: {}]
  %s1 = inlined_call_operand.hbm [shape: f32[8,16], index: 1, kind: input, shape index: {}]
  %s2 = inlined_call_operand.hbm [shape: bf16[32,128], index: 2, kind: input, shape index: {}]
  %s3 = inlined_call_operand.vmem [shape: f32[1,128], index: 3, kind: input, shape index: {}]
  %s4 = inlined_call_operand.hbm [shape: bf16[128,128], index: 4, kind: input, shape index: {}]
  %s5 = inlined_call_operand.vmem [shape: f32[1,128], index: 5, kind: input, shape index: {}]
  %s6 = inlined_call_operand.hbm [shape: bf16[128,128], index: 6, kind: input, shape index: {}]
  %s7 = inlined_call_operand.vmem [shape: f32[1,128], index: 7, kind: input, shape index: {}]
  %s8 = inlined_call_operand.hbm [shape: bf16[16,128], index: 8, kind: input, shape index: {}]
  %s9 = inlined_call_operand.vmem [shape: f32[1,128], index: 9, kind: input, shape index: {}]
  %s10 = inlined_call_operand.hbm [shape: bf16[128,128], index: 10, kind: input, shape index: {}]
  %s11 = inlined_call_operand.vmem [shape: f32[1,128], index: 11, kind: input, shape index: {}]
  %s12 = inlined_call_operand.hbm [shape: bf16[128,128], index: 12, kind: input, shape index: {}]
  %s13 = inlined_call_operand.vmem [shape: f32[1,128], index: 13, kind: input, shape index: {}]
  %s14 = inlined_call_operand.hbm [shape: bf16[128,128], index: 14, kind: input, shape index: {}]
  %s15 = inlined_call_operand.hbm [shape: bf16[128,128], index: 15, kind: input, shape index: {}]
  %s16 = inlined_call_operand.vmem [shape: f32[1,128], index: 16, kind: input, shape index: {}]
  %s17 = inlined_call_operand.hbm [shape: bf16[128,128], index: 17, kind: input, shape index: {}]
  %s18 = inlined_call_operand.vmem [shape: f32[1,128], index: 18, kind: input, shape index: {}]
  %s19 = inlined_call_operand.hbm [shape: bf16[128,128], index: 19, kind: input, shape index: {}]
  %s20 = inlined_call_operand.vmem [shape: f32[1,128], index: 20, kind: input, shape index: {}]
  %s21 = inlined_call_operand.hbm [shape: f32[8,128], index: 21, kind: output, shape index: {0}]
  %s22 = inlined_call_operand.hbm [shape: f32[8,128], index: 22, kind: output, shape index: {1}]
  %23 = xla_tuple %s21, %s22
  %s24 = sld [smem:[#allocation0]]
  $region150: #{tpu_custom_call.1} parent=0
    _
  %s26 = ssub.s32 1, %s24
  %s27 = scalar_select 0, %s26, %s24
  $region1: #{tpu_custom_call.1} parent=0
    #allocation2 [shape = 'u8[8192]{0}', space=vmem, size = 0x2000, scoped, tag = 'input window, operand 0, single buffered']
    #allocation3 [shape = 's32[1]{0}', space=sflag, size = 0x4, scoped, tag = 'scoped memory for tpu_custom_call.1']
    #allocation4 [shape = 's32[1]{0}', space=sflag, size = 0x4, scoped, tag = 'scoped memory for tpu_custom_call.1']
    #allocation5 [shape = 'u8[4096]{0}', space=vmem, size = 0x1000, scoped, tag = 'input window, operand 1, single buffered']
    #allocation6 [shape = 's32[1]{0}', space=sflag, size = 0x4, scoped, tag = 'scoped memory for tpu_custom_call.1']
    #allocation7 [shape = 'u8[8192]{0}', space=vmem, size = 0x2000, scoped, tag = 'input window, operand 2, single buffered']
    #allocation8 [shape = 'u8[32768]{0}', space=vmem, size = 0x8000, scoped, tag = 'input window, operand 4, single buffered']
    #allocation9 [shape = 's32[1]{0}', space=sflag, size = 0x4, scoped, tag = 'scoped memory for tpu_custom_call.1']
    #allocation10 [shape = 'u8[32768]{0}', space=vmem, size = 0x8000, scoped, tag = 'input window, operand 6, single buffered']
    #allocation11 [shape = 'u8[4096]{0}', space=vmem, size = 0x1000, scoped, tag = 'input window, operand 8, single buffered']
    #allocation12 [shape = 's32[1]{0}', space=sflag, size = 0x4, scoped, tag = 'scoped memory for tpu_custom_call.1']
    #allocation13 [shape = 'u8[32768]{0}', space=vmem, size = 0x8000, scoped, tag = 'input window, operand 10, single buffered']
    #allocation14 [shape = 'u8[32768]{0}', space=vmem, size = 0x8000, scoped, tag = 'input window, operand 12, single buffered']
    #allocation15 [shape = 's32[1]{0}', space=sflag, size = 0x4, scoped, tag = 'scoped memory for tpu_custom_call.1']
    #allocation16 [shape = 'u8[32768]{0}', space=vmem, size = 0x8000, scoped, tag = 'input window, operand 14, single buffered']
    #allocation17 [shape = 'u8[32768]{0}', space=vmem, size = 0x8000, scoped, tag = 'input window, operand 15, single buffered']
    #allocation18 [shape = 's32[1]{0}', space=sflag, size = 0x4, scoped, tag = 'scoped memory for tpu_custom_call.1']
    #allocation19 [shape = 'u8[32768]{0}', space=vmem, size = 0x8000, scoped, tag = 'input window, operand 17, single buffered']
    #allocation20 [shape = 'u8[32768]{0}', space=vmem, size = 0x8000, scoped, tag = 'input window, operand 19, single buffered']
    #allocation21 [shape = 's32[1]{0}', space=sflag, size = 0x4, scoped, tag = 'scoped memory for tpu_custom_call.1']
    #allocation22 [shape = 'u8[4096]{0}', space=vmem, size = 0x1000, scoped, tag = 'output window, operand 0, single buffered']
    #allocation23 [shape = 'u8[4096]{0}', space=vmem, size = 0x1000, scoped, tag = 'output window, operand 1, single buffered']
    #allocation24 [shape = 's32[1]{0}', space=sflag, size = 0x4, scoped, tag = 'scoped memory for tpu_custom_call.1']
    %28 = vsyncpa [#allocation3], 0
    %29 = vsyncpa [#allocation6], 0
    %30 = vsyncpa [#allocation9], 0
    %31 = vsyncpa [#allocation12], 0
    %32 = vsyncpa [#allocation15], 0
    %33 = vsyncpa [#allocation18], 0
    %34 = vsyncpa [#allocation21], 0
    %35 = vsyncpa [#allocation4], 0
    %36 = vsyncpa [#allocation24], 0
    // Predicated region
    $region2: #{tpu_custom_call.1} parent=1 // pred_check
      _
    $region3: #{tpu_custom_call.1} parent=1 // pred_check_branch
      %38 = sbr.rel (0) target = $region5
    $region4: #{tpu_custom_call.1} parent=1 // pred_region
      %40 = vsyncadd [#allocation3], 0
      %s41 = sshll.u32 %s0, 4
      %s42 = int_to_ptr.hbm [resolvable:$true] %s41
      %s43 = sshll.u32 [#allocation2], 4
      %s44 = int_to_ptr.vmem [resolvable:$true] %s43
      %49 = dma.hbm_to_vmem [thread:$0]  %s42, 256, %s44, [#allocation3], 128, 128, 8
    $region5: #{tpu_custom_call.1} parent=1 // pred_fallthru
      _
    // Predicated region
    $region6: #{tpu_custom_call.1} parent=1 // pred_check
      _
    $region7: #{tpu_custom_call.1} parent=1 // pred_check_branch
      %51 = sbr.rel (0) target = $region9
    $region8: #{tpu_custom_call.1} parent=1 // pred_region
      %53 = vsyncadd [#allocation6], 0
      %s55 = sshll.u32 %s1, 4
      %s56 = int_to_ptr.hbm [resolvable:$true] %s55
      %s57 = sshll.u32 [#allocation5], 4
      %s58 = int_to_ptr.vmem [resolvable:$true] %s57
      %60 = dma.hbm_to_vmem [thread:$0]  %s56, 128, %s58, [#allocation6]
    $region9: #{tpu_custom_call.1} parent=1 // pred_fallthru
      _
    // Predicated region
    $region10: #{tpu_custom_call.1} parent=1 // pred_check
      _
    $region11: #{tpu_custom_call.1} parent=1 // pred_check_branch
      %62 = sbr.rel (0) target = $region13
    $region12: #{tpu_custom_call.1} parent=1 // pred_region
      %64 = vsyncadd [#allocation6], 0
      %s65 = sshll.u32 %s2, 4
      %s66 = int_to_ptr.hbm [resolvable:$true] %s65
      %s67 = sshll.u32 [#allocation7], 4
      %s68 = int_to_ptr.vmem [resolvable:$true] %s67
      %73 = dma.hbm_to_vmem [thread:$0]  %s66, 256, %s68, [#allocation6], 64, 64, 4
    $region13: #{tpu_custom_call.1} parent=1 // pred_fallthru
      _
    // Predicated region
    $region14: #{tpu_custom_call.1} parent=1 // pred_check
      _
    $region15: #{tpu_custom_call.1} parent=1 // pred_check_branch
      %75 = sbr.rel (0) target = $region17
    $region16: #{tpu_custom_call.1} parent=1 // pred_region
      _
    $region17: #{tpu_custom_call.1} parent=1 // pred_fallthru
      _
    // Predicated region
    $region18: #{tpu_custom_call.1} parent=1 // pred_check
      _
    $region19: #{tpu_custom_call.1} parent=1 // pred_check_branch
      %77 = sbr.rel (0) target = $region21
    $region20: #{tpu_custom_call.1} parent=1 // pred_region
      %79 = vsyncadd [#allocation9], 0
      %s80 = sshll.u32 %s4, 4
      %s81 = int_to_ptr.hbm [resolvable:$true] %s80
      %s82 = sshll.u32 [#allocation8], 4
      %s83 = int_to_ptr.vmem [resolvable:$true] %s82
      %88 = dma.hbm_to_vmem [thread:$0]  %s81, 1024, %s83, [#allocation9], 64, 64, 4
    $region21: #{tpu_custom_call.1} parent=1 // pred_fallthru
      _
    // Predicated region
    $region22: #{tpu_custom_call.1} parent=1 // pred_check
      _
    $region23: #{tpu_custom_call.1} parent=1 // pred_check_branch
      %90 = sbr.rel (0) target = $region25
    $region24: #{tpu_custom_call.1} parent=1 // pred_region
      _
    $region25: #{tpu_custom_call.1} parent=1 // pred_fallthru
      _
    // Predicated region
    $region26: #{tpu_custom_call.1} parent=1 // pred_check
      _
    $region27: #{tpu_custom_call.1} parent=1 // pred_check_branch
      %92 = sbr.rel (0) target = $region29
    $region28: #{tpu_custom_call.1} parent=1 // pred_region
      %94 = vsyncadd [#allocation9], 0
      %s95 = sshll.u32 %s6, 4
      %s96 = int_to_ptr.hbm [resolvable:$true] %s95
      %s97 = sshll.u32 [#allocation10], 4
      %s98 = int_to_ptr.vmem [resolvable:$true] %s97
      %103 = dma.hbm_to_vmem [thread:$0]  %s96, 1024, %s98, [#allocation9], 64, 64, 4
    $region29: #{tpu_custom_call.1} parent=1 // pred_fallthru
      _
    // Predicated region
    $region30: #{tpu_custom_call.1} parent=1 // pred_check
      _
    $region31: #{tpu_custom_call.1} parent=1 // pred_check_branch
      %105 = sbr.rel (0) target = $region33
    $region32: #{tpu_custom_call.1} parent=1 // pred_region
      _
    $region33: #{tpu_custom_call.1} parent=1 // pred_fallthru
      _
    // Predicated region
    $region34: #{tpu_custom_call.1} parent=1 // pred_check
      _
    $region35: #{tpu_custom_call.1} parent=1 // pred_check_branch
      %107 = sbr.rel (0) target = $region37
    $region36: #{tpu_custom_call.1} parent=1 // pred_region
      %109 = vsyncadd [#allocation12], 0
      %s110 = sshll.u32 %s8, 4
      %s111 = int_to_ptr.hbm [resolvable:$true] %s110
      %s112 = sshll.u32 [#allocation11], 4
      %s113 = int_to_ptr.vmem [resolvable:$true] %s112
      %118 = dma.hbm_to_vmem [thread:$0]  %s111, 128, %s113, [#allocation12], 64, 64, 4
    $region37: #{tpu_custom_call.1} parent=1 // pred_fallthru
      _
    // Predicated region
    $region38: #{tpu_custom_call.1} parent=1 // pred_check
      _
    $region39: #{tpu_custom_call.1} parent=1 // pred_check_branch
      %120 = sbr.rel (0) target = $region41
    $region40: #{tpu_custom_call.1} parent=1 // pred_region
      _
    $region41: #{tpu_custom_call.1} parent=1 // pred_fallthru
      _
    // Predicated region
    $region42: #{tpu_custom_call.1} parent=1 // pred_check
      _
    $region43: #{tpu_custom_call.1} parent=1 // pred_check_branch
      %122 = sbr.rel (0) target = $region45
    $region44: #{tpu_custom_call.1} parent=1 // pred_region
      %124 = vsyncadd [#allocation12], 0
      %s125 = sshll.u32 %s10, 4
      %s126 = int_to_ptr.hbm [resolvable:$true] %s125
      %s127 = sshll.u32 [#allocation13], 4
      %s128 = int_to_ptr.vmem [resolvable:$true] %s127
      %133 = dma.hbm_to_vmem [thread:$0]  %s126, 1024, %s128, [#allocation12], 64, 64, 4
    $region45: #{tpu_custom_call.1} parent=1 // pred_fallthru
      _
    // Predicated region
    $region46: #{tpu_custom_call.1} parent=1 // pred_check
      _
    $region47: #{tpu_custom_call.1} parent=1 // pred_check_branch
      %135 = sbr.rel (0) target = $region49
    $region48: #{tpu_custom_call.1} parent=1 // pred_region
      _
    $region49: #{tpu_custom_call.1} parent=1 // pred_fallthru
      _
    // Predicated region
    $region50: #{tpu_custom_call.1} parent=1 // pred_check
      _
    $region51: #{tpu_custom_call.1} parent=1 // pred_check_branch
      %137 = sbr.rel (0) target = $region53
    $region52: #{tpu_custom_call.1} parent=1 // pred_region
      %139 = vsyncadd [#allocation15], 0
      %s140 = sshll.u32 %s12, 4
      %s141 = int_to_ptr.hbm [resolvable:$true] %s140
      %s142 = sshll.u32 [#allocation14], 4
      %s143 = int_to_ptr.vmem [resolvable:$true] %s142
      %148 = dma.hbm_to_vmem [thread:$0]  %s141, 1024, %s143, [#allocation15], 64, 64, 4
    $region53: #{tpu_custom_call.1} parent=1 // pred_fallthru
      _
    // Predicated region
    $region54: #{tpu_custom_call.1} parent=1 // pred_check
      _
    $region55: #{tpu_custom_call.1} parent=1 // pred_check_branch
      %150 = sbr.rel (0) target = $region57
    $region56: #{tpu_custom_call.1} parent=1 // pred_region
      _
    $region57: #{tpu_custom_call.1} parent=1 // pred_fallthru
      _
    // Predicated region
    $region58: #{tpu_custom_call.1} parent=1 // pred_check
      _
    $region59: #{tpu_custom_call.1} parent=1 // pred_check_branch
      %152 = sbr.rel (0) target = $region61
    $region60: #{tpu_custom_call.1} parent=1 // pred_region
      %154 = vsyncadd [#allocation15], 0
      %s155 = sshll.u32 %s14, 4
      %s156 = int_to_ptr.hbm [resolvable:$true] %s155
      %s157 = sshll.u32 [#allocation16], 4
      %s158 = int_to_ptr.vmem [resolvable:$true] %s157
      %163 = dma.hbm_to_vmem [thread:$0]  %s156, 1024, %s158, [#allocation15], 64, 64, 4
    $region61: #{tpu_custom_call.1} parent=1 // pred_fallthru
      _
    // Predicated region
    $region62: #{tpu_custom_call.1} parent=1 // pred_check
      _
    $region63: #{tpu_custom_call.1} parent=1 // pred_check_branch
      %165 = sbr.rel (0) target = $region65
    $region64: #{tpu_custom_call.1} parent=1 // pred_region
      %167 = vsyncadd [#allocation18], 0
      %s168 = sshll.u32 %s15, 4
      %s169 = int_to_ptr.hbm [resolvable:$true] %s168
      %s170 = sshll.u32 [#allocation17], 4
      %s171 = int_to_ptr.vmem [resolvable:$true] %s170
      %176 = dma.hbm_to_vmem [thread:$0]  %s169, 1024, %s171, [#allocation18], 64, 64, 4
    $region65: #{tpu_custom_call.1} parent=1 // pred_fallthru
      _
    // Predicated region
    $region66: #{tpu_custom_call.1} parent=1 // pred_check
      _
    $region67: #{tpu_custom_call.1} parent=1 // pred_check_branch
      %178 = sbr.rel (0) target = $region69
    $region68: #{tpu_custom_call.1} parent=1 // pred_region
      _
    $region69: #{tpu_custom_call.1} parent=1 // pred_fallthru
      _
    // Predicated region
    $region70: #{tpu_custom_call.1} parent=1 // pred_check
      _
    $region71: #{tpu_custom_call.1} parent=1 // pred_check_branch
      %180 = sbr.rel (0) target = $region73
    $region72: #{tpu_custom_call.1} parent=1 // pred_region
      %182 = vsyncadd [#allocation18], 0
      %s183 = sshll.u32 %s17, 4
      %s184 = int_to_ptr.hbm [resolvable:$true] %s183
      %s185 = sshll.u32 [#allocation19], 4
      %s186 = int_to_ptr.vmem [resolvable:$true] %s185
      %191 = dma.hbm_to_vmem [thread:$0]  %s184, 1024, %s186, [#allocation18], 64, 64, 4
    $region73: #{tpu_custom_call.1} parent=1 // pred_fallthru
      _
    // Predicated region
    $region74: #{tpu_custom_call.1} parent=1 // pred_check
      _
    $region75: #{tpu_custom_call.1} parent=1 // pred_check_branch
      %193 = sbr.rel (0) target = $region77
    $region76: #{tpu_custom_call.1} parent=1 // pred_region
      _
    $region77: #{tpu_custom_call.1} parent=1 // pred_fallthru
      _
    // Predicated region
    $region78: #{tpu_custom_call.1} parent=1 // pred_check
      _
    $region79: #{tpu_custom_call.1} parent=1 // pred_check_branch
      %195 = sbr.rel (0) target = $region81
    $region80: #{tpu_custom_call.1} parent=1 // pred_region
      %197 = vsyncadd [#allocation21], 0
      %s198 = sshll.u32 %s19, 4
      %s199 = int_to_ptr.hbm [resolvable:$true] %s198
      %s200 = sshll.u32 [#allocation20], 4
      %s201 = int_to_ptr.vmem [resolvable:$true] %s200
      %206 = dma.hbm_to_vmem [thread:$0]  %s199, 1024, %s201, [#allocation21], 64, 64, 4
    $region81: #{tpu_custom_call.1} parent=1 // pred_fallthru
      _
    // Predicated region
    $region82: #{tpu_custom_call.1} parent=1 // pred_check
      _
    $region83: #{tpu_custom_call.1} parent=1 // pred_check_branch
      %208 = sbr.rel (0) target = $region85
    $region84: #{tpu_custom_call.1} parent=1 // pred_region
      _
    $region85: #{tpu_custom_call.1} parent=1 // pred_fallthru
      _
    // Predicated region
    $region86: #{tpu_custom_call.1} parent=1 // pred_check
      _
    $region87: #{tpu_custom_call.1} parent=1 // pred_check_branch
      %210 = sbr.rel (0) target = $region89
    $region88: #{tpu_custom_call.1} parent=1 // pred_region
      %212 = dma.done [#allocation3], 256
    $region89: #{tpu_custom_call.1} parent=1 // pred_fallthru
      _
    // Predicated region
    $region90: #{tpu_custom_call.1} parent=1 // pred_check
      _
    $region91: #{tpu_custom_call.1} parent=1 // pred_check_branch
      %214 = sbr.rel (0) target = $region93
    $region92: #{tpu_custom_call.1} parent=1 // pred_region
      %216 = dma.done [#allocation6], 128
    $region93: #{tpu_custom_call.1} parent=1 // pred_fallthru
      _
    // Predicated region
    $region94: #{tpu_custom_call.1} parent=1 // pred_check
      _
    $region95: #{tpu_custom_call.1} parent=1 // pred_check_branch
      %218 = sbr.rel (0) target = $region97
    $region96: #{tpu_custom_call.1} parent=1 // pred_region
      %220 = dma.done [#allocation6], 256
    $region97: #{tpu_custom_call.1} parent=1 // pred_fallthru
      _
    // Predicated region
    $region98: #{tpu_custom_call.1} parent=1 // pred_check
      _
    $region99: #{tpu_custom_call.1} parent=1 // pred_check_branch
      %222 = sbr.rel (0) target = $region101
    $region100: #{tpu_custom_call.1} parent=1 // pred_region
      %224 = dma.done [#allocation9], 1024
    $region101: #{tpu_custom_call.1} parent=1 // pred_fallthru
      _
    // Predicated region
    $region102: #{tpu_custom_call.1} parent=1 // pred_check
      _
    $region103: #{tpu_custom_call.1} parent=1 // pred_check_branch
      %226 = sbr.rel (0) target = $region105
    $region104: #{tpu_custom_call.1} parent=1 // pred_region
      %228 = dma.done [#allocation9], 1024
    $region105: #{tpu_custom_call.1} parent=1 // pred_fallthru
      _
    // Predicated region
    $region106: #{tpu_custom_call.1} parent=1 // pred_check
      _
    $region107: #{tpu_custom_call.1} parent=1 // pred_check_branch
      %230 = sbr.rel (0) target = $region109
    $region108: #{tpu_custom_call.1} parent=1 // pred_region
      %232 = dma.done [#allocation12], 128
    $region109: #{tpu_custom_call.1} parent=1 // pred_fallthru
      _
    // Predicated region
    $region110: #{tpu_custom_call.1} parent=1 // pred_check
      _
    $region111: #{tpu_custom_call.1} parent=1 // pred_check_branch
      %234 = sbr.rel (0) target = $region113
    $region112: #{tpu_custom_call.1} parent=1 // pred_region
      %236 = dma.done [#allocation12], 1024
    $region113: #{tpu_custom_call.1} parent=1 // pred_fallthru
      _
    // Predicated region
    $region114: #{tpu_custom_call.1} parent=1 // pred_check
      _
    $region115: #{tpu_custom_call.1} parent=1 // pred_check_branch
      %238 = sbr.rel (0) target = $region117
    $region116: #{tpu_custom_call.1} parent=1 // pred_region
      %240 = dma.done [#allocation15], 1024
    $region117: #{tpu_custom_call.1} parent=1 // pred_fallthru
      _
    // Predicated region
    $region118: #{tpu_custom_call.1} parent=1 // pred_check
      _
    $region119: #{tpu_custom_call.1} parent=1 // pred_check_branch
      %242 = sbr.rel (0) target = $region121
    $region120: #{tpu_custom_call.1} parent=1 // pred_region
      %244 = dma.done [#allocation15], 1024
    $region121: #{tpu_custom_call.1} parent=1 // pred_fallthru
      _
    // Predicated region
    $region122: #{tpu_custom_call.1} parent=1 // pred_check
      _
    $region123: #{tpu_custom_call.1} parent=1 // pred_check_branch
      %246 = sbr.rel (0) target = $region125
    $region124: #{tpu_custom_call.1} parent=1 // pred_region
      %248 = dma.done [#allocation18], 1024
    $region125: #{tpu_custom_call.1} parent=1 // pred_fallthru
      _
    // Predicated region
    $region126: #{tpu_custom_call.1} parent=1 // pred_check
      _
    $region127: #{tpu_custom_call.1} parent=1 // pred_check_branch
      %250 = sbr.rel (0) target = $region129
    $region128: #{tpu_custom_call.1} parent=1 // pred_region
      %252 = dma.done [#allocation18], 1024
    $region129: #{tpu_custom_call.1} parent=1 // pred_fallthru
      _
    // Predicated region
    $region130: #{tpu_custom_call.1} parent=1 // pred_check
      _
    $region131: #{tpu_custom_call.1} parent=1 // pred_check_branch
      %254 = sbr.rel (0) target = $region133
    $region132: #{tpu_custom_call.1} parent=1 // pred_region
      %256 = dma.done [#allocation21], 1024
    $region133: #{tpu_custom_call.1} parent=1 // pred_fallthru
      _
    %v258 = vld [vmem:[#allocation2] sm:$0xff]
    %v259 = vld [vmem:[#allocation2 + $0x8] sm:$0xff]
    %v260 = vpack.c.bf16 %v259, %v258
    %v261 = vld [vmem:[#allocation7] sm:$0xf]
    %v262 = vld [vmem:[#allocation7 + $0x4] sm:$0xf]
    %v263 = vld [vmem:[#allocation7 + $0x8] sm:$0xf]
    %v264 = vld [vmem:[#allocation7 + $0xc] sm:$0xf]
    %v265 = vld [vmem:[%s3] sm:$0x1]
    %v267 = vperm.slane %v265, 0
    %v273 = vunpack.c.l.b16 %v261
    %v274 = vunpack.c.l.b16 %v262
    %v275 = vunpack.c.l.b16 %v263
    %v276 = vunpack.c.l.b16 %v264
    %v277 = vpack.c.b16 %v274, %v273
    %v278 = vpack.c.b16 %v276, %v275
    %vm281 = vcmask 261120
    %v283 = vsel %vm281, %v260, 0
    %285 = vmatpush.bf16.msra.mxu0 0
    %286 = vmatpush.bf16.msra.mxu0 0
    %287 = vmatpush.bf16.msra.mxu0 0
    %288 = vmatpush.bf16.msra.mxu0 0
    %289 = vmatpush.bf16.msra.mxu0 0
    %290 = vmatpush.bf16.msra.mxu0 0
    %291 = vmatpush.bf16.msra.mxu0 %v278
    %292 = vmatpush.bf16.msra.mxu0 %v277
    %293 = vmatmul.bf16.gmra.mxu0 %v283
    %v294 = vpop.f32.mrf.mxu0
    %v295 = vadd.f32 %v267, %v294
    %v296 = vpop.f32.mrf.mxu0
    %v297 = vadd.f32 %v267, %v296
    %298 = vdwg.mxu0
    %v299 = vmax.f32 %v295, 0.0
    %v300 = vmax.f32 %v297, 0.0
    %v301 = vpack.c.bf16 %v300, %v299
    %v302 = vld [vmem:[#allocation8] sm:$0xf]
    %v303 = vld [vmem:[#allocation8 + $0x4] sm:$0xf]
    %v304 = vld [vmem:[#allocation8 + $0x8] sm:$0xf]
    %v305 = vld [vmem:[#allocation8 + $0xc] sm:$0xf]
    %v306 = vld [vmem:[#allocation8 + $0x10] sm:$0xf]
    %v307 = vld [vmem:[#allocation8 + $0x14] sm:$0xf]
    %v308 = vld [vmem:[#allocation8 + $0x18] sm:$0xf]
    %v309 = vld [vmem:[#allocation8 + $0x1c] sm:$0xf]
    %v310 = vld [vmem:[#allocation8 + $0x20] sm:$0xf]
    %v311 = vld [vmem:[#allocation8 + $0x24] sm:$0xf]
    %v312 = vld [vmem:[#allocation8 + $0x28] sm:$0xf]
    %v313 = vld [vmem:[#allocation8 + $0x2c] sm:$0xf]
    %v314 = vld [vmem:[#allocation8 + $0x30] sm:$0xf]
    %v315 = vld [vmem:[#allocation8 + $0x34] sm:$0xf]
    %v316 = vld [vmem:[#allocation8 + $0x38] sm:$0xf]
    %v317 = vld [vmem:[#allocation8 + $0x3c] sm:$0xf]
    %v318 = vld [vmem:[%s5] sm:$0x1]
    %v320 = vperm.slane %v318, 0
    %v338 = vunpack.c.l.b16 %v302
    %v339 = vunpack.c.l.b16 %v303
    %v340 = vunpack.c.l.b16 %v304
    %v341 = vunpack.c.l.b16 %v305
    %v342 = vunpack.c.l.b16 %v306
    %v343 = vunpack.c.l.b16 %v307
    %v344 = vunpack.c.l.b16 %v308
    %v345 = vunpack.c.l.b16 %v309
    %v346 = vunpack.c.l.b16 %v310
    %v347 = vunpack.c.l.b16 %v311
    %v348 = vunpack.c.l.b16 %v312
    %v349 = vunpack.c.l.b16 %v313
    %v350 = vunpack.c.l.b16 %v314
    %v351 = vunpack.c.l.b16 %v315
    %v352 = vunpack.c.l.b16 %v316
    %v353 = vunpack.c.l.b16 %v317
    %v354 = vpack.c.b16 %v339, %v338
    %v355 = vpack.c.b16 %v341, %v340
    %v356 = vpack.c.b16 %v343, %v342
    %v357 = vpack.c.b16 %v345, %v344
    %v358 = vpack.c.b16 %v347, %v346
    %v359 = vpack.c.b16 %v349, %v348
    %v360 = vpack.c.b16 %v351, %v350
    %v361 = vpack.c.b16 %v353, %v352
    %370 = vmatpush.bf16.msra.mxu0 %v361
    %371 = vmatpush.bf16.msra.mxu0 %v360
    %372 = vmatpush.bf16.msra.mxu0 %v359
    %373 = vmatpush.bf16.msra.mxu0 %v358
    %374 = vmatpush.bf16.msra.mxu0 %v357
    %375 = vmatpush.bf16.msra.mxu0 %v356
    %376 = vmatpush.bf16.msra.mxu0 %v355
    %377 = vmatpush.bf16.msra.mxu0 %v354
    %378 = vmatmul.bf16.gmra.mxu0 %v301
    %v379 = vpop.f32.mrf.mxu0
    %v380 = vadd.f32 %v320, %v379
    %v381 = vpop.f32.mrf.mxu0
    %v382 = vadd.f32 %v320, %v381
    %383 = vdwg.mxu0
    %v384 = vmax.f32 %v380, 0.0
    %v385 = vmax.f32 %v382, 0.0
    %v386 = vpack.c.bf16 %v385, %v384
    %v387 = vld [vmem:[#allocation10] sm:$0xf]
    %v388 = vld [vmem:[#allocation10 + $0x4] sm:$0xf]
    %v389 = vld [vmem:[#allocation10 + $0x8] sm:$0xf]
    %v390 = vld [vmem:[#allocation10 + $0xc] sm:$0xf]
    %v391 = vld [vmem:[#allocation10 + $0x10] sm:$0xf]
    %v392 = vld [vmem:[#allocation10 + $0x14] sm:$0xf]
    %v393 = vld [vmem:[#allocation10 + $0x18] sm:$0xf]
    %v394 = vld [vmem:[#allocation10 + $0x1c] sm:$0xf]
    %v395 = vld [vmem:[#allocation10 + $0x20] sm:$0xf]
    %v396 = vld [vmem:[#allocation10 + $0x24] sm:$0xf]
    %v397 = vld [vmem:[#allocation10 + $0x28] sm:$0xf]
    %v398 = vld [vmem:[#allocation10 + $0x2c] sm:$0xf]
    %v399 = vld [vmem:[#allocation10 + $0x30] sm:$0xf]
    %v400 = vld [vmem:[#allocation10 + $0x34] sm:$0xf]
    %v401 = vld [vmem:[#allocation10 + $0x38] sm:$0xf]
    %v402 = vld [vmem:[#allocation10 + $0x3c] sm:$0xf]
    %v403 = vld [vmem:[%s7] sm:$0x1]
    %v405 = vperm.slane %v403, 0
    %v423 = vunpack.c.l.b16 %v387
    %v424 = vunpack.c.l.b16 %v388
    %v425 = vunpack.c.l.b16 %v389
    %v426 = vunpack.c.l.b16 %v390
    %v427 = vunpack.c.l.b16 %v391
    %v428 = vunpack.c.l.b16 %v392
    %v429 = vunpack.c.l.b16 %v393
    %v430 = vunpack.c.l.b16 %v394
    %v431 = vunpack.c.l.b16 %v395
    %v432 = vunpack.c.l.b16 %v396
    %v433 = vunpack.c.l.b16 %v397
    %v434 = vunpack.c.l.b16 %v398
    %v435 = vunpack.c.l.b16 %v399
    %v436 = vunpack.c.l.b16 %v400
    %v437 = vunpack.c.l.b16 %v401
    %v438 = vunpack.c.l.b16 %v402
    %v439 = vpack.c.b16 %v424, %v423
    %v440 = vpack.c.b16 %v426, %v425
    %v441 = vpack.c.b16 %v428, %v427
    %v442 = vpack.c.b16 %v430, %v429
    %v443 = vpack.c.b16 %v432, %v431
    %v444 = vpack.c.b16 %v434, %v433
    %v445 = vpack.c.b16 %v436, %v435
    %v446 = vpack.c.b16 %v438, %v437
    %455 = vmatpush.bf16.msra.mxu0 %v446
    %456 = vmatpush.bf16.msra.mxu0 %v445
    %457 = vmatpush.bf16.msra.mxu0 %v444
    %458 = vmatpush.bf16.msra.mxu0 %v443
    %459 = vmatpush.bf16.msra.mxu0 %v442
    %460 = vmatpush.bf16.msra.mxu0 %v441
    %461 = vmatpush.bf16.msra.mxu0 %v440
    %462 = vmatpush.bf16.msra.mxu0 %v439
    %463 = vmatmul.bf16.gmra.mxu0 %v386
    %v464 = vpop.f32.mrf.mxu0
    %v465 = vadd.f32 %v405, %v464
    %v466 = vpop.f32.mrf.mxu0
    %v467 = vadd.f32 %v405, %v466
    %468 = vdwg.mxu0
    %v469 = vld [vmem:[#allocation5] sm:$0xff]
    %v470 = vpack.c.bf16 %v469, %v469
    %v471 = vld [vmem:[#allocation11] sm:$0xf]
    %v472 = vld [vmem:[#allocation11 + $0x4] sm:$0xf]
    %v473 = vld [vmem:[%s9] sm:$0x1]
    %v475 = vperm.slane %v473, 0
    %v479 = vunpack.c.l.b16 %v471
    %v480 = vunpack.c.l.b16 %v472
    %v481 = vpack.c.b16 %v480, %v479
    %vm483 = vcmask 130048
    %v485 = vsel %vm483, %v470, 0
    %487 = vmatpush.bf16.msra.mxu0 0
    %488 = vmatpush.bf16.msra.mxu0 0
    %489 = vmatpush.bf16.msra.mxu0 0
    %490 = vmatpush.bf16.msra.mxu0 0
    %491 = vmatpush.bf16.msra.mxu0 0
    %492 = vmatpush.bf16.msra.mxu0 0
    %493 = vmatpush.bf16.msra.mxu0 0
    %494 = vmatpush.bf16.msra.mxu0 %v481
    %495 = vmatmul.bf16.gmra.mxu0 %v485
    %v496 = vpop.f32.mrf.mxu0
    %v497 = vadd.f32 %v475, %v496
    %v498 = vpop.f32.mrf.mxu0
    %499 = vdwg.mxu0
    %v500 = vmax.f32 %v497, 0.0
    %v501 = vpack.c.bf16 %v500, %v500
    %v502 = vld [vmem:[#allocation13] sm:$0xf]
    %v503 = vld [vmem:[#allocation13 + $0x4] sm:$0xf]
    %v504 = vld [vmem:[#allocation13 + $0x8] sm:$0xf]
    %v505 = vld [vmem:[#allocation13 + $0xc] sm:$0xf]
    %v506 = vld [vmem:[#allocation13 + $0x10] sm:$0xf]
    %v507 = vld [vmem:[#allocation13 + $0x14] sm:$0xf]
    %v508 = vld [vmem:[#allocation13 + $0x18] sm:$0xf]
    %v509 = vld [vmem:[#allocation13 + $0x1c] sm:$0xf]
    %v510 = vld [vmem:[#allocation13 + $0x20] sm:$0xf]
    %v511 = vld [vmem:[#allocation13 + $0x24] sm:$0xf]
    %v512 = vld [vmem:[#allocation13 + $0x28] sm:$0xf]
    %v513 = vld [vmem:[#allocation13 + $0x2c] sm:$0xf]
    %v514 = vld [vmem:[#allocation13 + $0x30] sm:$0xf]
    %v515 = vld [vmem:[#allocation13 + $0x34] sm:$0xf]
    %v516 = vld [vmem:[#allocation13 + $0x38] sm:$0xf]
    %v517 = vld [vmem:[#allocation13 + $0x3c] sm:$0xf]
    %v518 = vld [vmem:[%s11] sm:$0x1]
    %v520 = vperm.slane %v518, 0
    %v538 = vunpack.c.l.b16 %v502
    %v539 = vunpack.c.l.b16 %v503
    %v540 = vunpack.c.l.b16 %v504
    %v541 = vunpack.c.l.b16 %v505
    %v542 = vunpack.c.l.b16 %v506
    %v543 = vunpack.c.l.b16 %v507
    %v544 = vunpack.c.l.b16 %v508
    %v545 = vunpack.c.l.b16 %v509
    %v546 = vunpack.c.l.b16 %v510
    %v547 = vunpack.c.l.b16 %v511
    %v548 = vunpack.c.l.b16 %v512
    %v549 = vunpack.c.l.b16 %v513
    %v550 = vunpack.c.l.b16 %v514
    %v551 = vunpack.c.l.b16 %v515
    %v552 = vunpack.c.l.b16 %v516
    %v553 = vunpack.c.l.b16 %v517
    %v554 = vpack.c.b16 %v539, %v538
    %v555 = vpack.c.b16 %v541, %v540
    %v556 = vpack.c.b16 %v543, %v542
    %v557 = vpack.c.b16 %v545, %v544
    %v558 = vpack.c.b16 %v547, %v546
    %v559 = vpack.c.b16 %v549, %v548
    %v560 = vpack.c.b16 %v551, %v550
    %v561 = vpack.c.b16 %v553, %v552
    %570 = vmatpush.bf16.msra.mxu0 %v561
    %571 = vmatpush.bf16.msra.mxu0 %v560
    %572 = vmatpush.bf16.msra.mxu0 %v559
    %573 = vmatpush.bf16.msra.mxu0 %v558
    %574 = vmatpush.bf16.msra.mxu0 %v557
    %575 = vmatpush.bf16.msra.mxu0 %v556
    %576 = vmatpush.bf16.msra.mxu0 %v555
    %577 = vmatpush.bf16.msra.mxu0 %v554
    %578 = vmatmul.bf16.gmra.mxu0 %v501
    %v579 = vpop.f32.mrf.mxu0
    %v580 = vadd.f32 %v520, %v579
    %v581 = vpop.f32.mrf.mxu0
    %582 = vdwg.mxu0
    %v583 = vmax.f32 %v580, 0.0
    %v584 = vpack.c.bf16 %v583, %v583
    %v585 = vld [vmem:[#allocation14] sm:$0xf]
    %v586 = vld [vmem:[#allocation14 + $0x4] sm:$0xf]
    %v587 = vld [vmem:[#allocation14 + $0x8] sm:$0xf]
    %v588 = vld [vmem:[#allocation14 + $0xc] sm:$0xf]
    %v589 = vld [vmem:[#allocation14 + $0x10] sm:$0xf]
    %v590 = vld [vmem:[#allocation14 + $0x14] sm:$0xf]
    %v591 = vld [vmem:[#allocation14 + $0x18] sm:$0xf]
    %v592 = vld [vmem:[#allocation14 + $0x1c] sm:$0xf]
    %v593 = vld [vmem:[#allocation14 + $0x20] sm:$0xf]
    %v594 = vld [vmem:[#allocation14 + $0x24] sm:$0xf]
    %v595 = vld [vmem:[#allocation14 + $0x28] sm:$0xf]
    %v596 = vld [vmem:[#allocation14 + $0x2c] sm:$0xf]
    %v597 = vld [vmem:[#allocation14 + $0x30] sm:$0xf]
    %v598 = vld [vmem:[#allocation14 + $0x34] sm:$0xf]
    %v599 = vld [vmem:[#allocation14 + $0x38] sm:$0xf]
    %v600 = vld [vmem:[#allocation14 + $0x3c] sm:$0xf]
    %v601 = vld [vmem:[%s13] sm:$0x1]
    %v603 = vperm.slane %v601, 0
    %v621 = vunpack.c.l.b16 %v585
    %v622 = vunpack.c.l.b16 %v586
    %v623 = vunpack.c.l.b16 %v587
    %v624 = vunpack.c.l.b16 %v588
    %v625 = vunpack.c.l.b16 %v589
    %v626 = vunpack.c.l.b16 %v590
    %v627 = vunpack.c.l.b16 %v591
    %v628 = vunpack.c.l.b16 %v592
    %v629 = vunpack.c.l.b16 %v593
    %v630 = vunpack.c.l.b16 %v594
    %v631 = vunpack.c.l.b16 %v595
    %v632 = vunpack.c.l.b16 %v596
    %v633 = vunpack.c.l.b16 %v597
    %v634 = vunpack.c.l.b16 %v598
    %v635 = vunpack.c.l.b16 %v599
    %v636 = vunpack.c.l.b16 %v600
    %v637 = vpack.c.b16 %v622, %v621
    %v638 = vpack.c.b16 %v624, %v623
    %v639 = vpack.c.b16 %v626, %v625
    %v640 = vpack.c.b16 %v628, %v627
    %v641 = vpack.c.b16 %v630, %v629
    %v642 = vpack.c.b16 %v632, %v631
    %v643 = vpack.c.b16 %v634, %v633
    %v644 = vpack.c.b16 %v636, %v635
    %653 = vmatpush.bf16.msra.mxu0 %v644
    %654 = vmatpush.bf16.msra.mxu0 %v643
    %655 = vmatpush.bf16.msra.mxu0 %v642
    %656 = vmatpush.bf16.msra.mxu0 %v641
    %657 = vmatpush.bf16.msra.mxu0 %v640
    %658 = vmatpush.bf16.msra.mxu0 %v639
    %659 = vmatpush.bf16.msra.mxu0 %v638
    %660 = vmatpush.bf16.msra.mxu0 %v637
    %661 = vmatmul.bf16.gmra.mxu0 %v584
    %v662 = vpop.f32.mrf.mxu0
    %v663 = vadd.f32 %v603, %v662
    %v664 = vpop.f32.mrf.mxu0
    %665 = vdwg.mxu0
    %666 = vst [vmem:[#allocation22] sm:$0xff] %v663
    %v667 = vpack.c.bf16 %v465, %v465
    %v668 = vld [vmem:[#allocation16] sm:$0xf]
    %v669 = vld [vmem:[#allocation16 + $0x4] sm:$0xf]
    %v670 = vld [vmem:[#allocation16 + $0x8] sm:$0xf]
    %v671 = vld [vmem:[#allocation16 + $0xc] sm:$0xf]
    %v672 = vld [vmem:[#allocation16 + $0x10] sm:$0xf]
    %v673 = vld [vmem:[#allocation16 + $0x14] sm:$0xf]
    %v674 = vld [vmem:[#allocation16 + $0x18] sm:$0xf]
    %v675 = vld [vmem:[#allocation16 + $0x1c] sm:$0xf]
    %v676 = vld [vmem:[#allocation16 + $0x20] sm:$0xf]
    %v677 = vld [vmem:[#allocation16 + $0x24] sm:$0xf]
    %v678 = vld [vmem:[#allocation16 + $0x28] sm:$0xf]
    %v679 = vld [vmem:[#allocation16 + $0x2c] sm:$0xf]
    %v680 = vld [vmem:[#allocation16 + $0x30] sm:$0xf]
    %v681 = vld [vmem:[#allocation16 + $0x34] sm:$0xf]
    %v682 = vld [vmem:[#allocation16 + $0x38] sm:$0xf]
    %v683 = vld [vmem:[#allocation16 + $0x3c] sm:$0xf]
    %v684 = vpack.c.bf16 %v467, %v467
    %v685 = vld [vmem:[#allocation17] sm:$0xf]
    %v686 = vld [vmem:[#allocation17 + $0x4] sm:$0xf]
    %v687 = vld [vmem:[#allocation17 + $0x8] sm:$0xf]
    %v688 = vld [vmem:[#allocation17 + $0xc] sm:$0xf]
    %v689 = vld [vmem:[#allocation17 + $0x10] sm:$0xf]
    %v690 = vld [vmem:[#allocation17 + $0x14] sm:$0xf]
    %v691 = vld [vmem:[#allocation17 + $0x18] sm:$0xf]
    %v692 = vld [vmem:[#allocation17 + $0x1c] sm:$0xf]
    %v693 = vld [vmem:[#allocation17 + $0x20] sm:$0xf]
    %v694 = vld [vmem:[#allocation17 + $0x24] sm:$0xf]
    %v695 = vld [vmem:[#allocation17 + $0x28] sm:$0xf]
    %v696 = vld [vmem:[#allocation17 + $0x2c] sm:$0xf]
    %v697 = vld [vmem:[#allocation17 + $0x30] sm:$0xf]
    %v698 = vld [vmem:[#allocation17 + $0x34] sm:$0xf]
    %v699 = vld [vmem:[#allocation17 + $0x38] sm:$0xf]
    %v700 = vld [vmem:[#allocation17 + $0x3c] sm:$0xf]
    %v717 = vunpack.c.l.b16 %v685
    %v718 = vunpack.c.l.b16 %v686
    %v719 = vunpack.c.l.b16 %v687
    %v720 = vunpack.c.l.b16 %v688
    %v721 = vunpack.c.l.b16 %v689
    %v722 = vunpack.c.l.b16 %v690
    %v723 = vunpack.c.l.b16 %v691
    %v724 = vunpack.c.l.b16 %v692
    %v725 = vunpack.c.l.b16 %v693
    %v726 = vunpack.c.l.b16 %v694
    %v727 = vunpack.c.l.b16 %v695
    %v728 = vunpack.c.l.b16 %v696
    %v729 = vunpack.c.l.b16 %v697
    %v730 = vunpack.c.l.b16 %v698
    %v731 = vunpack.c.l.b16 %v699
    %v732 = vunpack.c.l.b16 %v700
    %v733 = vpack.c.b16 %v718, %v717
    %v734 = vpack.c.b16 %v720, %v719
    %v735 = vpack.c.b16 %v722, %v721
    %v736 = vpack.c.b16 %v724, %v723
    %v737 = vpack.c.b16 %v726, %v725
    %v738 = vpack.c.b16 %v728, %v727
    %v739 = vpack.c.b16 %v730, %v729
    %v740 = vpack.c.b16 %v732, %v731
    %749 = vmatpush.bf16.msra.mxu0 %v740
    %750 = vmatpush.bf16.msra.mxu0 %v739
    %751 = vmatpush.bf16.msra.mxu0 %v738
    %752 = vmatpush.bf16.msra.mxu0 %v737
    %753 = vmatpush.bf16.msra.mxu0 %v736
    %754 = vmatpush.bf16.msra.mxu0 %v735
    %755 = vmatpush.bf16.msra.mxu0 %v734
    %756 = vmatpush.bf16.msra.mxu0 %v733
    %757 = vmatmul.bf16.gmra.mxu0 %v684
    %v758 = vpop.f32.mrf.mxu0
    %v759 = vadd.f32 0.0, %v758
    %v760 = vpop.f32.mrf.mxu0
    %761 = vdwg.mxu0
    %v778 = vunpack.c.l.b16 %v668
    %v779 = vunpack.c.l.b16 %v669
    %v780 = vunpack.c.l.b16 %v670
    %v781 = vunpack.c.l.b16 %v671
    %v782 = vunpack.c.l.b16 %v672
    %v783 = vunpack.c.l.b16 %v673
    %v784 = vunpack.c.l.b16 %v674
    %v785 = vunpack.c.l.b16 %v675
    %v786 = vunpack.c.l.b16 %v676
    %v787 = vunpack.c.l.b16 %v677
    %v788 = vunpack.c.l.b16 %v678
    %v789 = vunpack.c.l.b16 %v679
    %v790 = vunpack.c.l.b16 %v680
    %v791 = vunpack.c.l.b16 %v681
    %v792 = vunpack.c.l.b16 %v682
    %v793 = vunpack.c.l.b16 %v683
    %v794 = vpack.c.b16 %v779, %v778
    %v795 = vpack.c.b16 %v781, %v780
    %v796 = vpack.c.b16 %v783, %v782
    %v797 = vpack.c.b16 %v785, %v784
    %v798 = vpack.c.b16 %v787, %v786
    %v799 = vpack.c.b16 %v789, %v788
    %v800 = vpack.c.b16 %v791, %v790
    %v801 = vpack.c.b16 %v793, %v792
    %810 = vmatpush.bf16.msra.mxu0 %v801
    %811 = vmatpush.bf16.msra.mxu0 %v800
    %812 = vmatpush.bf16.msra.mxu0 %v799
    %813 = vmatpush.bf16.msra.mxu0 %v798
    %814 = vmatpush.bf16.msra.mxu0 %v797
    %815 = vmatpush.bf16.msra.mxu0 %v796
    %816 = vmatpush.bf16.msra.mxu0 %v795
    %817 = vmatpush.bf16.msra.mxu0 %v794
    %818 = vmatmul.bf16.gmra.mxu0 %v667
    %v819 = vpop.f32.mrf.mxu0
    %v820 = vadd.f32 %v759, %v819
    %v821 = vpop.f32.mrf.mxu0
    %822 = vdwg.mxu0
    %v823 = vld [vmem:[%s16] sm:$0x1]
    %v825 = vperm.slane %v823, 0
    %v827 = vadd.f32 %v820, %v825
    %v828 = vmax.f32 %v827, 0.0
    %v829 = vpack.c.bf16 %v828, %v828
    %v830 = vld [vmem:[#allocation19] sm:$0xf]
    %v831 = vld [vmem:[#allocation19 + $0x4] sm:$0xf]
    %v832 = vld [vmem:[#allocation19 + $0x8] sm:$0xf]
    %v833 = vld [vmem:[#allocation19 + $0xc] sm:$0xf]
    %v834 = vld [vmem:[#allocation19 + $0x10] sm:$0xf]
    %v835 = vld [vmem:[#allocation19 + $0x14] sm:$0xf]
    %v836 = vld [vmem:[#allocation19 + $0x18] sm:$0xf]
    %v837 = vld [vmem:[#allocation19 + $0x1c] sm:$0xf]
    %v838 = vld [vmem:[#allocation19 + $0x20] sm:$0xf]
    %v839 = vld [vmem:[#allocation19 + $0x24] sm:$0xf]
    %v840 = vld [vmem:[#allocation19 + $0x28] sm:$0xf]
    %v841 = vld [vmem:[#allocation19 + $0x2c] sm:$0xf]
    %v842 = vld [vmem:[#allocation19 + $0x30] sm:$0xf]
    %v843 = vld [vmem:[#allocation19 + $0x34] sm:$0xf]
    %v844 = vld [vmem:[#allocation19 + $0x38] sm:$0xf]
    %v845 = vld [vmem:[#allocation19 + $0x3c] sm:$0xf]
    %v846 = vld [vmem:[%s18] sm:$0x1]
    %v848 = vperm.slane %v846, 0
    %v866 = vunpack.c.l.b16 %v830
    %v867 = vunpack.c.l.b16 %v831
    %v868 = vunpack.c.l.b16 %v832
    %v869 = vunpack.c.l.b16 %v833
    %v870 = vunpack.c.l.b16 %v834
    %v871 = vunpack.c.l.b16 %v835
    %v872 = vunpack.c.l.b16 %v836
    %v873 = vunpack.c.l.b16 %v837
    %v874 = vunpack.c.l.b16 %v838
    %v875 = vunpack.c.l.b16 %v839
    %v876 = vunpack.c.l.b16 %v840
    %v877 = vunpack.c.l.b16 %v841
    %v878 = vunpack.c.l.b16 %v842
    %v879 = vunpack.c.l.b16 %v843
    %v880 = vunpack.c.l.b16 %v844
    %v881 = vunpack.c.l.b16 %v845
    %v882 = vpack.c.b16 %v867, %v866
    %v883 = vpack.c.b16 %v869, %v868
    %v884 = vpack.c.b16 %v871, %v870
    %v885 = vpack.c.b16 %v873, %v872
    %v886 = vpack.c.b16 %v875, %v874
    %v887 = vpack.c.b16 %v877, %v876
    %v888 = vpack.c.b16 %v879, %v878
    %v889 = vpack.c.b16 %v881, %v880
    %898 = vmatpush.bf16.msra.mxu0 %v889
    %899 = vmatpush.bf16.msra.mxu0 %v888
    %900 = vmatpush.bf16.msra.mxu0 %v887
    %901 = vmatpush.bf16.msra.mxu0 %v886
    %902 = vmatpush.bf16.msra.mxu0 %v885
    %903 = vmatpush.bf16.msra.mxu0 %v884
    %904 = vmatpush.bf16.msra.mxu0 %v883
    %905 = vmatpush.bf16.msra.mxu0 %v882
    %906 = vmatmul.bf16.gmra.mxu0 %v829
    %v907 = vpop.f32.mrf.mxu0
    %v908 = vadd.f32 %v848, %v907
    %v909 = vpop.f32.mrf.mxu0
    %910 = vdwg.mxu0
    %v911 = vmax.f32 %v908, 0.0
    %v912 = vpack.c.bf16 %v911, %v911
    %v913 = vld [vmem:[#allocation20] sm:$0xf]
    %v914 = vld [vmem:[#allocation20 + $0x4] sm:$0xf]
    %v915 = vld [vmem:[#allocation20 + $0x8] sm:$0xf]
    %v916 = vld [vmem:[#allocation20 + $0xc] sm:$0xf]
    %v917 = vld [vmem:[#allocation20 + $0x10] sm:$0xf]
    %v918 = vld [vmem:[#allocation20 + $0x14] sm:$0xf]
    %v919 = vld [vmem:[#allocation20 + $0x18] sm:$0xf]
    %v920 = vld [vmem:[#allocation20 + $0x1c] sm:$0xf]
    %v921 = vld [vmem:[#allocation20 + $0x20] sm:$0xf]
    %v922 = vld [vmem:[#allocation20 + $0x24] sm:$0xf]
    %v923 = vld [vmem:[#allocation20 + $0x28] sm:$0xf]
    %v924 = vld [vmem:[#allocation20 + $0x2c] sm:$0xf]
    %v925 = vld [vmem:[#allocation20 + $0x30] sm:$0xf]
    %v926 = vld [vmem:[#allocation20 + $0x34] sm:$0xf]
    %v927 = vld [vmem:[#allocation20 + $0x38] sm:$0xf]
    %v928 = vld [vmem:[#allocation20 + $0x3c] sm:$0xf]
    %v929 = vld [vmem:[%s20] sm:$0x1]
    %v931 = vperm.slane %v929, 0
    %v949 = vunpack.c.l.b16 %v913
    %v950 = vunpack.c.l.b16 %v914
    %v951 = vunpack.c.l.b16 %v915
    %v952 = vunpack.c.l.b16 %v916
    %v953 = vunpack.c.l.b16 %v917
    %v954 = vunpack.c.l.b16 %v918
    %v955 = vunpack.c.l.b16 %v919
    %v956 = vunpack.c.l.b16 %v920
    %v957 = vunpack.c.l.b16 %v921
    %v958 = vunpack.c.l.b16 %v922
    %v959 = vunpack.c.l.b16 %v923
    %v960 = vunpack.c.l.b16 %v924
    %v961 = vunpack.c.l.b16 %v925
    %v962 = vunpack.c.l.b16 %v926
    %v963 = vunpack.c.l.b16 %v927
    %v964 = vunpack.c.l.b16 %v928
    %v965 = vpack.c.b16 %v950, %v949
    %v966 = vpack.c.b16 %v952, %v951
    %v967 = vpack.c.b16 %v954, %v953
    %v968 = vpack.c.b16 %v956, %v955
    %v969 = vpack.c.b16 %v958, %v957
    %v970 = vpack.c.b16 %v960, %v959
    %v971 = vpack.c.b16 %v962, %v961
    %v972 = vpack.c.b16 %v964, %v963
    %981 = vmatpush.bf16.msra.mxu0 %v972
    %982 = vmatpush.bf16.msra.mxu0 %v971
    %983 = vmatpush.bf16.msra.mxu0 %v970
    %984 = vmatpush.bf16.msra.mxu0 %v969
    %985 = vmatpush.bf16.msra.mxu0 %v968
    %986 = vmatpush.bf16.msra.mxu0 %v967
    %987 = vmatpush.bf16.msra.mxu0 %v966
    %988 = vmatpush.bf16.msra.mxu0 %v965
    %989 = vmatmul.bf16.gmra.mxu0 %v912
    %v990 = vpop.f32.mrf.mxu0
    %v991 = vadd.f32 %v931, %v990
    %v992 = vpop.f32.mrf.mxu0
    %993 = vdwg.mxu0
    %994 = vst [vmem:[#allocation23] sm:$0xff] %v991
    // Predicated region
    $region134: #{tpu_custom_call.1} parent=1 // pred_check
      _
    $region135: #{tpu_custom_call.1} parent=1 // pred_check_branch
      %996 = sbr.rel (0) target = $region137
    $region136: #{tpu_custom_call.1} parent=1 // pred_region
      %998 = vsyncadd [#allocation4], 0
      %s1000 = sshll.u32 [#allocation22], 4
      %s1001 = int_to_ptr.vmem [resolvable:$true] %s1000
      %s1002 = sshll.u32 %s21, 4
      %s1003 = int_to_ptr.hbm [resolvable:$true] %s1002
      %1005 = dma.vmem_to_hbm [thread:$0]  %s1001, 128, %s1003, [#allocation4]
    $region137: #{tpu_custom_call.1} parent=1 // pred_fallthru
      _
    // Predicated region
    $region138: #{tpu_custom_call.1} parent=1 // pred_check
      _
    $region139: #{tpu_custom_call.1} parent=1 // pred_check_branch
      %1007 = sbr.rel (0) target = $region141
    $region140: #{tpu_custom_call.1} parent=1 // pred_region
      %1009 = vsyncadd [#allocation24], 0
      %s1011 = sshll.u32 [#allocation23], 4
      %s1012 = int_to_ptr.vmem [resolvable:$true] %s1011
      %s1013 = sshll.u32 %s22, 4
      %s1014 = int_to_ptr.hbm [resolvable:$true] %s1013
      %1016 = dma.vmem_to_hbm [thread:$0]  %s1012, 128, %s1014, [#allocation24]
    $region141: #{tpu_custom_call.1} parent=1 // pred_fallthru
      _
    // Predicated region
    $region142: #{tpu_custom_call.1} parent=1 // pred_check
      _
    $region143: #{tpu_custom_call.1} parent=1 // pred_check_branch
      %1018 = sbr.rel (0) target = $region145
    $region144: #{tpu_custom_call.1} parent=1 // pred_region
      %1020 = dma.done [#allocation4], 128
    $region145: #{tpu_custom_call.1} parent=1 // pred_fallthru
      _
    // Predicated region
    $region146: #{tpu_custom_call.1} parent=1 // pred_check
      _
    $region147: #{tpu_custom_call.1} parent=1 // pred_check_branch
      %1022 = sbr.rel (0) target = $region149
    $region148: #{tpu_custom_call.1} parent=1 // pred_region
      %1024 = dma.done [#allocation24], 128
    $region149: #{tpu_custom_call.1} parent=1 // pred_fallthru
      _
    %1025 = vsyncpa [#allocation3], 1
    %1026 = vsyncpa [#allocation6], 1
    %1027 = vsyncpa [#allocation9], 1
    %1028 = vsyncpa [#allocation12], 1
    %1029 = vsyncpa [#allocation15], 1
    %1030 = vsyncpa [#allocation18], 1
    %1031 = vsyncpa [#allocation21], 1
    %1032 = vsyncpa [#allocation4], 1
    %1033 = vsyncpa [#allocation24], 1

// kernel: tpu_custom_call.1
$region0: #{tpu_custom_call.1}
  #allocation0 [shape = 'u32[]', space=smem, size = 0x4, offset = 0x4, fixed_abs, tag = 'smem constant byte address 0x4 - core index']
  #allocation1 [shape = 'u32[72,128]{1,0:T(1,128)}', space=vmem, size = 0x9000, scoped, tag = 'internal scratch']
  %s0 = inlined_call_operand.hbm [shape: f32[2,8,32], index: 0, kind: input, shape index: {}]
  %s1 = inlined_call_operand.hbm [shape: f32[8,16], index: 1, kind: input, shape index: {}]
  %s2 = inlined_call_operand.hbm [shape: bf16[32,128], index: 2, kind: input, shape index: {}]
  %s3 = inlined_call_operand.vmem [shape: f32[1,128], index: 3, kind: input, shape index: {}]
  %s4 = inlined_call_operand.hbm [shape: bf16[128,128], index: 4, kind: input, shape index: {}]
  %s5 = inlined_call_operand.vmem [shape: f32[1,128], index: 5, kind: input, shape index: {}]
  %s6 = inlined_call_operand.hbm [shape: bf16[128,128], index: 6, kind: input, shape index: {}]
  %s7 = inlined_call_operand.vmem [shape: f32[1,128], index: 7, kind: input, shape index: {}]
  %s8 = inlined_call_operand.hbm [shape: bf16[16,128], index: 8, kind: input, shape index: {}]
  %s9 = inlined_call_operand.vmem [shape: f32[1,128], index: 9, kind: input, shape index: {}]
  %s10 = inlined_call_operand.hbm [shape: bf16[128,128], index: 10, kind: input, shape index: {}]
  %s11 = inlined_call_operand.vmem [shape: f32[1,128], index: 11, kind: input, shape index: {}]
  %s12 = inlined_call_operand.hbm [shape: bf16[128,128], index: 12, kind: input, shape index: {}]
  %s13 = inlined_call_operand.vmem [shape: f32[1,128], index: 13, kind: input, shape index: {}]
  %s14 = inlined_call_operand.hbm [shape: bf16[128,128], index: 14, kind: input, shape index: {}]
  %s15 = inlined_call_operand.hbm [shape: bf16[128,128], index: 15, kind: input, shape index: {}]
  %s16 = inlined_call_operand.vmem [shape: f32[1,128], index: 16, kind: input, shape index: {}]
  %s17 = inlined_call_operand.hbm [shape: bf16[128,128], index: 17, kind: input, shape index: {}]
  %s18 = inlined_call_operand.vmem [shape: f32[1,128], index: 18, kind: input, shape index: {}]
  %s19 = inlined_call_operand.hbm [shape: bf16[128,128], index: 19, kind: input, shape index: {}]
  %s20 = inlined_call_operand.vmem [shape: f32[1,128], index: 20, kind: input, shape index: {}]
  %s21 = inlined_call_operand.hbm [shape: f32[8,128], index: 21, kind: output, shape index: {0}]
  %s22 = inlined_call_operand.hbm [shape: f32[8,128], index: 22, kind: output, shape index: {1}]
  %23 = xla_tuple %s21, %s22
  %s24 = sld [smem:[#allocation0]]
  $region150: #{tpu_custom_call.1} parent=0
    _
  %s26 = ssub.s32 1, %s24
  %s27 = scalar_select 0, %s26, %s24
  $region1: #{tpu_custom_call.1} parent=0
    #allocation2 [shape = 'u8[8192]{0}', space=vmem, size = 0x2000, scoped, tag = 'input window, operand 0, single buffered']
    #allocation3 [shape = 's32[1]{0}', space=sflag, size = 0x4, scoped, tag = 'scoped memory for tpu_custom_call.1']
    #allocation4 [shape = 's32[1]{0}', space=sflag, size = 0x4, scoped, tag = 'scoped memory for tpu_custom_call.1']
    #allocation5 [shape = 'u8[4096]{0}', space=vmem, size = 0x1000, scoped, tag = 'input window, operand 1, single buffered']
    #allocation6 [shape = 's32[1]{0}', space=sflag, size = 0x4, scoped, tag = 'scoped memory for tpu_custom_call.1']
    #allocation7 [shape = 'u8[8192]{0}', space=vmem, size = 0x2000, scoped, tag = 'input window, operand 2, single buffered']
    #allocation8 [shape = 'u8[32768]{0}', space=vmem, size = 0x8000, scoped, tag = 'input window, operand 4, single buffered']
    #allocation9 [shape = 's32[1]{0}', space=sflag, size = 0x4, scoped, tag = 'scoped memory for tpu_custom_call.1']
    #allocation10 [shape = 'u8[32768]{0}', space=vmem, size = 0x8000, scoped, tag = 'input window, operand 6, single buffered']
    #allocation11 [shape = 'u8[4096]{0}', space=vmem, size = 0x1000, scoped, tag = 'input window, operand 8, single buffered']
    #allocation12 [shape = 's32[1]{0}', space=sflag, size = 0x4, scoped, tag = 'scoped memory for tpu_custom_call.1']
    #allocation13 [shape = 'u8[32768]{0}', space=vmem, size = 0x8000, scoped, tag = 'input window, operand 10, single buffered']
    #allocation14 [shape = 'u8[32768]{0}', space=vmem, size = 0x8000, scoped, tag = 'input window, operand 12, single buffered']
    #allocation15 [shape = 's32[1]{0}', space=sflag, size = 0x4, scoped, tag = 'scoped memory for tpu_custom_call.1']
    #allocation16 [shape = 'u8[32768]{0}', space=vmem, size = 0x8000, scoped, tag = 'input window, operand 14, single buffered']
    #allocation17 [shape = 'u8[32768]{0}', space=vmem, size = 0x8000, scoped, tag = 'input window, operand 15, single buffered']
    #allocation18 [shape = 's32[1]{0}', space=sflag, size = 0x4, scoped, tag = 'scoped memory for tpu_custom_call.1']
    #allocation19 [shape = 'u8[32768]{0}', space=vmem, size = 0x8000, scoped, tag = 'input window, operand 17, single buffered']
    #allocation20 [shape = 'u8[32768]{0}', space=vmem, size = 0x8000, scoped, tag = 'input window, operand 19, single buffered']
    #allocation21 [shape = 's32[1]{0}', space=sflag, size = 0x4, scoped, tag = 'scoped memory for tpu_custom_call.1']
    #allocation22 [shape = 'u8[4096]{0}', space=vmem, size = 0x1000, scoped, tag = 'output window, operand 0, single buffered']
    #allocation23 [shape = 'u8[4096]{0}', space=vmem, size = 0x1000, scoped, tag = 'output window, operand 1, single buffered']
    #allocation24 [shape = 's32[1]{0}', space=sflag, size = 0x4, scoped, tag = 'scoped memory for tpu_custom_call.1']
    %28 = vsyncpa [#allocation3], 0
    %29 = vsyncpa [#allocation6], 0
    %30 = vsyncpa [#allocation9], 0
    %31 = vsyncpa [#allocation12], 0
    %32 = vsyncpa [#allocation15], 0
    %33 = vsyncpa [#allocation18], 0
    %34 = vsyncpa [#allocation21], 0
    %35 = vsyncpa [#allocation4], 0
    %36 = vsyncpa [#allocation24], 0
    // Predicated region
    $region2: #{tpu_custom_call.1} parent=1 // pred_check
      _
    $region3: #{tpu_custom_call.1} parent=1 // pred_check_branch
      %38 = sbr.rel (0) target = $region5
    $region4: #{tpu_custom_call.1} parent=1 // pred_region
      %40 = vsyncadd [#allocation3], 0
      %s41 = sshll.u32 %s0, 4
      %s42 = int_to_ptr.hbm [resolvable:$true] %s41
      %s43 = sshll.u32 [#allocation2], 4
      %s44 = int_to_ptr.vmem [resolvable:$true] %s43
      %49 = dma.hbm_to_vmem [thread:$0]  %s42, 256, %s44, [#allocation3], 128, 128, 8
    $region5: #{tpu_custom_call.1} parent=1 // pred_fallthru
      _
    // Predicated region
    $region6: #{tpu_custom_call.1} parent=1 // pred_check
      _
    $region7: #{tpu_custom_call.1} parent=1 // pred_check_branch
      %51 = sbr.rel (0) target = $region9
    $region8: #{tpu_custom_call.1} parent=1 // pred_region
      %53 = vsyncadd [#allocation6], 0
      %s55 = sshll.u32 %s1, 4
      %s56 = int_to_ptr.hbm [resolvable:$true] %s55
      %s57 = sshll.u32 [#allocation5], 4
      %s58 = int_to_ptr.vmem [resolvable:$true] %s57
      %60 = dma.hbm_to_vmem [thread:$0]  %s56, 128, %s58, [#allocation6]
    $region9: #{tpu_custom_call.1} parent=1 // pred_fallthru
      _
    // Predicated region
    $region10: #{tpu_custom_call.1} parent=1 // pred_check
      _
    $region11: #{tpu_custom_call.1} parent=1 // pred_check_branch
      %62 = sbr.rel (0) target = $region13
    $region12: #{tpu_custom_call.1} parent=1 // pred_region
      %64 = vsyncadd [#allocation6], 0
      %s65 = sshll.u32 %s2, 4
      %s66 = int_to_ptr.hbm [resolvable:$true] %s65
      %s67 = sshll.u32 [#allocation7], 4
      %s68 = int_to_ptr.vmem [resolvable:$true] %s67
      %73 = dma.hbm_to_vmem [thread:$0]  %s66, 256, %s68, [#allocation6], 64, 64, 4
    $region13: #{tpu_custom_call.1} parent=1 // pred_fallthru
      _
    // Predicated region
    $region14: #{tpu_custom_call.1} parent=1 // pred_check
      _
    $region15: #{tpu_custom_call.1} parent=1 // pred_check_branch
      %75 = sbr.rel (0) target = $region17
    $region16: #{tpu_custom_call.1} parent=1 // pred_region
      _
    $region17: #{tpu_custom_call.1} parent=1 // pred_fallthru
      _
    // Predicated region
    $region18: #{tpu_custom_call.1} parent=1 // pred_check
      _
    $region19: #{tpu_custom_call.1} parent=1 // pred_check_branch
      %77 = sbr.rel (0) target = $region21
    $region20: #{tpu_custom_call.1} parent=1 // pred_region
      %79 = vsyncadd [#allocation9], 0
      %s80 = sshll.u32 %s4, 4
      %s81 = int_to_ptr.hbm [resolvable:$true] %s80
      %s82 = sshll.u32 [#allocation8], 4
      %s83 = int_to_ptr.vmem [resolvable:$true] %s82
      %88 = dma.hbm_to_vmem [thread:$0]  %s81, 1024, %s83, [#allocation9], 64, 64, 4
    $region21: #{tpu_custom_call.1} parent=1 // pred_fallthru
      _
    // Predicated region
    $region22: #{tpu_custom_call.1} parent=1 // pred_check
      _
    $region23: #{tpu_custom_call.1} parent=1 // pred_check_branch
      %90 = sbr.rel (0) target = $region25
    $region24: #{tpu_custom_call.1} parent=1 // pred_region
      _
    $region25: #{tpu_custom_call.1} parent=1 // pred_fallthru
      _
    // Predicated region
    $region26: #{tpu_custom_call.1} parent=1 // pred_check
      _
    $region27: #{tpu_custom_call.1} parent=1 // pred_check_branch
      %92 = sbr.rel (0) target = $region29
    $region28: #{tpu_custom_call.1} parent=1 // pred_region
      %94 = vsyncadd [#allocation9], 0
      %s95 = sshll.u32 %s6, 4
      %s96 = int_to_ptr.hbm [resolvable:$true] %s95
      %s97 = sshll.u32 [#allocation10], 4
      %s98 = int_to_ptr.vmem [resolvable:$true] %s97
      %103 = dma.hbm_to_vmem [thread:$0]  %s96, 1024, %s98, [#allocation9], 64, 64, 4
    $region29: #{tpu_custom_call.1} parent=1 // pred_fallthru
      _
    // Predicated region
    $region30: #{tpu_custom_call.1} parent=1 // pred_check
      _
    $region31: #{tpu_custom_call.1} parent=1 // pred_check_branch
      %105 = sbr.rel (0) target = $region33
    $region32: #{tpu_custom_call.1} parent=1 // pred_region
      _
    $region33: #{tpu_custom_call.1} parent=1 // pred_fallthru
      _
    // Predicated region
    $region34: #{tpu_custom_call.1} parent=1 // pred_check
      _
    $region35: #{tpu_custom_call.1} parent=1 // pred_check_branch
      %107 = sbr.rel (0) target = $region37
    $region36: #{tpu_custom_call.1} parent=1 // pred_region
      %109 = vsyncadd [#allocation12], 0
      %s110 = sshll.u32 %s8, 4
      %s111 = int_to_ptr.hbm [resolvable:$true] %s110
      %s112 = sshll.u32 [#allocation11], 4
      %s113 = int_to_ptr.vmem [resolvable:$true] %s112
      %118 = dma.hbm_to_vmem [thread:$0]  %s111, 128, %s113, [#allocation12], 64, 64, 4
    $region37: #{tpu_custom_call.1} parent=1 // pred_fallthru
      _
    // Predicated region
    $region38: #{tpu_custom_call.1} parent=1 // pred_check
      _
    $region39: #{tpu_custom_call.1} parent=1 // pred_check_branch
      %120 = sbr.rel (0) target = $region41
    $region40: #{tpu_custom_call.1} parent=1 // pred_region
      _
    $region41: #{tpu_custom_call.1} parent=1 // pred_fallthru
      _
    // Predicated region
    $region42: #{tpu_custom_call.1} parent=1 // pred_check
      _
    $region43: #{tpu_custom_call.1} parent=1 // pred_check_branch
      %122 = sbr.rel (0) target = $region45
    $region44: #{tpu_custom_call.1} parent=1 // pred_region
      %124 = vsyncadd [#allocation12], 0
      %s125 = sshll.u32 %s10, 4
      %s126 = int_to_ptr.hbm [resolvable:$true] %s125
      %s127 = sshll.u32 [#allocation13], 4
      %s128 = int_to_ptr.vmem [resolvable:$true] %s127
      %133 = dma.hbm_to_vmem [thread:$0]  %s126, 1024, %s128, [#allocation12], 64, 64, 4
    $region45: #{tpu_custom_call.1} parent=1 // pred_fallthru
      _
    // Predicated region
    $region46: #{tpu_custom_call.1} parent=1 // pred_check
      _
    $region47: #{tpu_custom_call.1} parent=1 // pred_check_branch
      %135 = sbr.rel (0) target = $region49
    $region48: #{tpu_custom_call.1} parent=1 // pred_region
      _
    $region49: #{tpu_custom_call.1} parent=1 // pred_fallthru
      _
    // Predicated region
    $region50: #{tpu_custom_call.1} parent=1 // pred_check
      _
    $region51: #{tpu_custom_call.1} parent=1 // pred_check_branch
      %137 = sbr.rel (0) target = $region53
    $region52: #{tpu_custom_call.1} parent=1 // pred_region
      %139 = vsyncadd [#allocation15], 0
      %s140 = sshll.u32 %s12, 4
      %s141 = int_to_ptr.hbm [resolvable:$true] %s140
      %s142 = sshll.u32 [#allocation14], 4
      %s143 = int_to_ptr.vmem [resolvable:$true] %s142
      %148 = dma.hbm_to_vmem [thread:$0]  %s141, 1024, %s143, [#allocation15], 64, 64, 4
    $region53: #{tpu_custom_call.1} parent=1 // pred_fallthru
      _
    // Predicated region
    $region54: #{tpu_custom_call.1} parent=1 // pred_check
      _
    $region55: #{tpu_custom_call.1} parent=1 // pred_check_branch
      %150 = sbr.rel (0) target = $region57
    $region56: #{tpu_custom_call.1} parent=1 // pred_region
      _
    $region57: #{tpu_custom_call.1} parent=1 // pred_fallthru
      _
    // Predicated region
    $region58: #{tpu_custom_call.1} parent=1 // pred_check
      _
    $region59: #{tpu_custom_call.1} parent=1 // pred_check_branch
      %152 = sbr.rel (0) target = $region61
    $region60: #{tpu_custom_call.1} parent=1 // pred_region
      %154 = vsyncadd [#allocation15], 0
      %s155 = sshll.u32 %s14, 4
      %s156 = int_to_ptr.hbm [resolvable:$true] %s155
      %s157 = sshll.u32 [#allocation16], 4
      %s158 = int_to_ptr.vmem [resolvable:$true] %s157
      %163 = dma.hbm_to_vmem [thread:$0]  %s156, 1024, %s158, [#allocation15], 64, 64, 4
    $region61: #{tpu_custom_call.1} parent=1 // pred_fallthru
      _
    // Predicated region
    $region62: #{tpu_custom_call.1} parent=1 // pred_check
      _
    $region63: #{tpu_custom_call.1} parent=1 // pred_check_branch
      %165 = sbr.rel (0) target = $region65
    $region64: #{tpu_custom_call.1} parent=1 // pred_region
      %167 = vsyncadd [#allocation18], 0
      %s168 = sshll.u32 %s15, 4
      %s169 = int_to_ptr.hbm [resolvable:$true] %s168
      %s170 = sshll.u32 [#allocation17], 4
      %s171 = int_to_ptr.vmem [resolvable:$true] %s170
      %176 = dma.hbm_to_vmem [thread:$0]  %s169, 1024, %s171, [#allocation18], 64, 64, 4
    $region65: #{tpu_custom_call.1} parent=1 // pred_fallthru
      _
    // Predicated region
    $region66: #{tpu_custom_call.1} parent=1 // pred_check
      _
    $region67: #{tpu_custom_call.1} parent=1 // pred_check_branch
      %178 = sbr.rel (0) target = $region69
    $region68: #{tpu_custom_call.1} parent=1 // pred_region
      _
    $region69: #{tpu_custom_call.1} parent=1 // pred_fallthru
      _
    // Predicated region
    $region70: #{tpu_custom_call.1} parent=1 // pred_check
      _
    $region71: #{tpu_custom_call.1} parent=1 // pred_check_branch
      %180 = sbr.rel (0) target = $region73
    $region72: #{tpu_custom_call.1} parent=1 // pred_region
      %182 = vsyncadd [#allocation18], 0
      %s183 = sshll.u32 %s17, 4
      %s184 = int_to_ptr.hbm [resolvable:$true] %s183
      %s185 = sshll.u32 [#allocation19], 4
      %s186 = int_to_ptr.vmem [resolvable:$true] %s185
      %191 = dma.hbm_to_vmem [thread:$0]  %s184, 1024, %s186, [#allocation18], 64, 64, 4
    $region73: #{tpu_custom_call.1} parent=1 // pred_fallthru
      _
    // Predicated region
    $region74: #{tpu_custom_call.1} parent=1 // pred_check
      _
    $region75: #{tpu_custom_call.1} parent=1 // pred_check_branch
      %193 = sbr.rel (0) target = $region77
    $region76: #{tpu_custom_call.1} parent=1 // pred_region
      _
    $region77: #{tpu_custom_call.1} parent=1 // pred_fallthru
      _
    // Predicated region
    $region78: #{tpu_custom_call.1} parent=1 // pred_check
      _
    $region79: #{tpu_custom_call.1} parent=1 // pred_check_branch
      %195 = sbr.rel (0) target = $region81
    $region80: #{tpu_custom_call.1} parent=1 // pred_region
      %197 = vsyncadd [#allocation21], 0
      %s198 = sshll.u32 %s19, 4
      %s199 = int_to_ptr.hbm [resolvable:$true] %s198
      %s200 = sshll.u32 [#allocation20], 4
      %s201 = int_to_ptr.vmem [resolvable:$true] %s200
      %206 = dma.hbm_to_vmem [thread:$0]  %s199, 1024, %s201, [#allocation21], 64, 64, 4
    $region81: #{tpu_custom_call.1} parent=1 // pred_fallthru
      _
    // Predicated region
    $region82: #{tpu_custom_call.1} parent=1 // pred_check
      _
    $region83: #{tpu_custom_call.1} parent=1 // pred_check_branch
      %208 = sbr.rel (0) target = $region85
    $region84: #{tpu_custom_call.1} parent=1 // pred_region
      _
    $region85: #{tpu_custom_call.1} parent=1 // pred_fallthru
      _
    // Predicated region
    $region86: #{tpu_custom_call.1} parent=1 // pred_check
      _
    $region87: #{tpu_custom_call.1} parent=1 // pred_check_branch
      %210 = sbr.rel (0) target = $region89
    $region88: #{tpu_custom_call.1} parent=1 // pred_region
      %212 = dma.done [#allocation3], 256
    $region89: #{tpu_custom_call.1} parent=1 // pred_fallthru
      _
    // Predicated region
    $region90: #{tpu_custom_call.1} parent=1 // pred_check
      _
    $region91: #{tpu_custom_call.1} parent=1 // pred_check_branch
      %214 = sbr.rel (0) target = $region93
    $region92: #{tpu_custom_call.1} parent=1 // pred_region
      %216 = dma.done [#allocation6], 128
    $region93: #{tpu_custom_call.1} parent=1 // pred_fallthru
      _
    // Predicated region
    $region94: #{tpu_custom_call.1} parent=1 // pred_check
      _
    $region95: #{tpu_custom_call.1} parent=1 // pred_check_branch
      %218 = sbr.rel (0) target = $region97
    $region96: #{tpu_custom_call.1} parent=1 // pred_region
      %220 = dma.done [#allocation6], 256
    $region97: #{tpu_custom_call.1} parent=1 // pred_fallthru
      _
    // Predicated region
    $region98: #{tpu_custom_call.1} parent=1 // pred_check
      _
    $region99: #{tpu_custom_call.1} parent=1 // pred_check_branch
      %222 = sbr.rel (0) target = $region101
    $region100: #{tpu_custom_call.1} parent=1 // pred_region
      %224 = dma.done [#allocation9], 1024
    $region101: #{tpu_custom_call.1} parent=1 // pred_fallthru
      _
    // Predicated region
    $region102: #{tpu_custom_call.1} parent=1 // pred_check
      _
    $region103: #{tpu_custom_call.1} parent=1 // pred_check_branch
      %226 = sbr.rel (0) target = $region105
    $region104: #{tpu_custom_call.1} parent=1 // pred_region
      %228 = dma.done [#allocation9], 1024
    $region105: #{tpu_custom_call.1} parent=1 // pred_fallthru
      _
    // Predicated region
    $region106: #{tpu_custom_call.1} parent=1 // pred_check
      _
    $region107: #{tpu_custom_call.1} parent=1 // pred_check_branch
      %230 = sbr.rel (0) target = $region109
    $region108: #{tpu_custom_call.1} parent=1 // pred_region
      %232 = dma.done [#allocation12], 128
    $region109: #{tpu_custom_call.1} parent=1 // pred_fallthru
      _
    // Predicated region
    $region110: #{tpu_custom_call.1} parent=1 // pred_check
      _
    $region111: #{tpu_custom_call.1} parent=1 // pred_check_branch
      %234 = sbr.rel (0) target = $region113
    $region112: #{tpu_custom_call.1} parent=1 // pred_region
      %236 = dma.done [#allocation12], 1024
    $region113: #{tpu_custom_call.1} parent=1 // pred_fallthru
      _
    // Predicated region
    $region114: #{tpu_custom_call.1} parent=1 // pred_check
      _
    $region115: #{tpu_custom_call.1} parent=1 // pred_check_branch
      %238 = sbr.rel (0) target = $region117
    $region116: #{tpu_custom_call.1} parent=1 // pred_region
      %240 = dma.done [#allocation15], 1024
    $region117: #{tpu_custom_call.1} parent=1 // pred_fallthru
      _
    // Predicated region
    $region118: #{tpu_custom_call.1} parent=1 // pred_check
      _
    $region119: #{tpu_custom_call.1} parent=1 // pred_check_branch
      %242 = sbr.rel (0) target = $region121
    $region120: #{tpu_custom_call.1} parent=1 // pred_region
      %244 = dma.done [#allocation15], 1024
    $region121: #{tpu_custom_call.1} parent=1 // pred_fallthru
      _
    // Predicated region
    $region122: #{tpu_custom_call.1} parent=1 // pred_check
      _
    $region123: #{tpu_custom_call.1} parent=1 // pred_check_branch
      %246 = sbr.rel (0) target = $region125
    $region124: #{tpu_custom_call.1} parent=1 // pred_region
      %248 = dma.done [#allocation18], 1024
    $region125: #{tpu_custom_call.1} parent=1 // pred_fallthru
      _
    // Predicated region
    $region126: #{tpu_custom_call.1} parent=1 // pred_check
      _
    $region127: #{tpu_custom_call.1} parent=1 // pred_check_branch
      %250 = sbr.rel (0) target = $region129
    $region128: #{tpu_custom_call.1} parent=1 // pred_region
      %252 = dma.done [#allocation18], 1024
    $region129: #{tpu_custom_call.1} parent=1 // pred_fallthru
      _
    // Predicated region
    $region130: #{tpu_custom_call.1} parent=1 // pred_check
      _
    $region131: #{tpu_custom_call.1} parent=1 // pred_check_branch
      %254 = sbr.rel (0) target = $region133
    $region132: #{tpu_custom_call.1} parent=1 // pred_region
      %256 = dma.done [#allocation21], 1024
    $region133: #{tpu_custom_call.1} parent=1 // pred_fallthru
      _
    %v258 = vld [vmem:[#allocation2] sm:$0xff]
    %v259 = vld [vmem:[#allocation2 + $0x8] sm:$0xff]
    %v260 = vpack.c.bf16 %v259, %v258
    %v261 = vld [vmem:[#allocation7] sm:$0xf]
    %v262 = vld [vmem:[#allocation7 + $0x4] sm:$0xf]
    %v263 = vld [vmem:[#allocation7 + $0x8] sm:$0xf]
    %v264 = vld [vmem:[#allocation7 + $0xc] sm:$0xf]
    %v265 = vld [vmem:[%s3] sm:$0x1]
    %v267 = vperm.slane %v265, 0
    %v273 = vunpack.c.l.b16 %v261
    %v274 = vunpack.c.l.b16 %v262
    %v275 = vunpack.c.l.b16 %v263
    %v276 = vunpack.c.l.b16 %v264
    %v277 = vpack.c.b16 %v274, %v273
    %v278 = vpack.c.b16 %v276, %v275
    %vm281 = vcmask 261120
    %v283 = vsel %vm281, %v260, 0
    %285 = vmatpush.bf16.msra.mxu0 0
    %286 = vmatpush.bf16.msra.mxu0 0
    %287 = vmatpush.bf16.msra.mxu0 0
    %288 = vmatpush.bf16.msra.mxu0 0
    %289 = vmatpush.bf16.msra.mxu0 0
    %290 = vmatpush.bf16.msra.mxu0 0
    %291 = vmatpush.bf16.msra.mxu0 %v278
    %292 = vmatpush.bf16.msra.mxu0 %v277
    %293 = vmatmul.bf16.gmra.mxu0 %v283
    %v294 = vpop.f32.mrf.mxu0
    %v295 = vadd.f32 %v267, %v294
    %v296 = vpop.f32.mrf.mxu0
    %v297 = vadd.f32 %v267, %v296
    %298 = vdwg.mxu0
    %v299 = vmax.f32 %v295, 0.0
    %v300 = vmax.f32 %v297, 0.0
    %v301 = vpack.c.bf16 %v300, %v299
    %v302 = vld [vmem:[#allocation8] sm:$0xf]
    %v303 = vld [vmem:[#allocation8 + $0x4] sm:$0xf]
    %v304 = vld [vmem:[#allocation8 + $0x8] sm:$0xf]
    %v305 = vld [vmem:[#allocation8 + $0xc] sm:$0xf]
    %v306 = vld [vmem:[#allocation8 + $0x10] sm:$0xf]
    %v307 = vld [vmem:[#allocation8 + $0x14] sm:$0xf]
    %v308 = vld [vmem:[#allocation8 + $0x18] sm:$0xf]
    %v309 = vld [vmem:[#allocation8 + $0x1c] sm:$0xf]
    %v310 = vld [vmem:[#allocation8 + $0x20] sm:$0xf]
    %v311 = vld [vmem:[#allocation8 + $0x24] sm:$0xf]
    %v312 = vld [vmem:[#allocation8 + $0x28] sm:$0xf]
    %v313 = vld [vmem:[#allocation8 + $0x2c] sm:$0xf]
    %v314 = vld [vmem:[#allocation8 + $0x30] sm:$0xf]
    %v315 = vld [vmem:[#allocation8 + $0x34] sm:$0xf]
    %v316 = vld [vmem:[#allocation8 + $0x38] sm:$0xf]
    %v317 = vld [vmem:[#allocation8 + $0x3c] sm:$0xf]
    %v318 = vld [vmem:[%s5] sm:$0x1]
    %v320 = vperm.slane %v318, 0
    %v338 = vunpack.c.l.b16 %v302
    %v339 = vunpack.c.l.b16 %v303
    %v340 = vunpack.c.l.b16 %v304
    %v341 = vunpack.c.l.b16 %v305
    %v342 = vunpack.c.l.b16 %v306
    %v343 = vunpack.c.l.b16 %v307
    %v344 = vunpack.c.l.b16 %v308
    %v345 = vunpack.c.l.b16 %v309
    %v346 = vunpack.c.l.b16 %v310
    %v347 = vunpack.c.l.b16 %v311
    %v348 = vunpack.c.l.b16 %v312
    %v349 = vunpack.c.l.b16 %v313
    %v350 = vunpack.c.l.b16 %v314
    %v351 = vunpack.c.l.b16 %v315
    %v352 = vunpack.c.l.b16 %v316
    %v353 = vunpack.c.l.b16 %v317
    %v354 = vpack.c.b16 %v339, %v338
    %v355 = vpack.c.b16 %v341, %v340
    %v356 = vpack.c.b16 %v343, %v342
    %v357 = vpack.c.b16 %v345, %v344
    %v358 = vpack.c.b16 %v347, %v346
    %v359 = vpack.c.b16 %v349, %v348
    %v360 = vpack.c.b16 %v351, %v350
    %v361 = vpack.c.b16 %v353, %v352
    %370 = vmatpush.bf16.msra.mxu0 %v361
    %371 = vmatpush.bf16.msra.mxu0 %v360
    %372 = vmatpush.bf16.msra.mxu0 %v359
    %373 = vmatpush.bf16.msra.mxu0 %v358
    %374 = vmatpush.bf16.msra.mxu0 %v357
    %375 = vmatpush.bf16.msra.mxu0 %v356
    %376 = vmatpush.bf16.msra.mxu0 %v355
    %377 = vmatpush.bf16.msra.mxu0 %v354
    %378 = vmatmul.bf16.gmra.mxu0 %v301
    %v379 = vpop.f32.mrf.mxu0
    %v380 = vadd.f32 %v320, %v379
    %v381 = vpop.f32.mrf.mxu0
    %v382 = vadd.f32 %v320, %v381
    %383 = vdwg.mxu0
    %v384 = vmax.f32 %v380, 0.0
    %v385 = vmax.f32 %v382, 0.0
    %v386 = vpack.c.bf16 %v385, %v384
    %v387 = vld [vmem:[#allocation10] sm:$0xf]
    %v388 = vld [vmem:[#allocation10 + $0x4] sm:$0xf]
    %v389 = vld [vmem:[#allocation10 + $0x8] sm:$0xf]
    %v390 = vld [vmem:[#allocation10 + $0xc] sm:$0xf]
    %v391 = vld [vmem:[#allocation10 + $0x10] sm:$0xf]
    %v392 = vld [vmem:[#allocation10 + $0x14] sm:$0xf]
    %v393 = vld [vmem:[#allocation10 + $0x18] sm:$0xf]
    %v394 = vld [vmem:[#allocation10 + $0x1c] sm:$0xf]
    %v395 = vld [vmem:[#allocation10 + $0x20] sm:$0xf]
    %v396 = vld [vmem:[#allocation10 + $0x24] sm:$0xf]
    %v397 = vld [vmem:[#allocation10 + $0x28] sm:$0xf]
    %v398 = vld [vmem:[#allocation10 + $0x2c] sm:$0xf]
    %v399 = vld [vmem:[#allocation10 + $0x30] sm:$0xf]
    %v400 = vld [vmem:[#allocation10 + $0x34] sm:$0xf]
    %v401 = vld [vmem:[#allocation10 + $0x38] sm:$0xf]
    %v402 = vld [vmem:[#allocation10 + $0x3c] sm:$0xf]
    %v403 = vld [vmem:[%s7] sm:$0x1]
    %v405 = vperm.slane %v403, 0
    %v423 = vunpack.c.l.b16 %v387
    %v424 = vunpack.c.l.b16 %v388
    %v425 = vunpack.c.l.b16 %v389
    %v426 = vunpack.c.l.b16 %v390
    %v427 = vunpack.c.l.b16 %v391
    %v428 = vunpack.c.l.b16 %v392
    %v429 = vunpack.c.l.b16 %v393
    %v430 = vunpack.c.l.b16 %v394
    %v431 = vunpack.c.l.b16 %v395
    %v432 = vunpack.c.l.b16 %v396
    %v433 = vunpack.c.l.b16 %v397
    %v434 = vunpack.c.l.b16 %v398
    %v435 = vunpack.c.l.b16 %v399
    %v436 = vunpack.c.l.b16 %v400
    %v437 = vunpack.c.l.b16 %v401
    %v438 = vunpack.c.l.b16 %v402
    %v439 = vpack.c.b16 %v424, %v423
    %v440 = vpack.c.b16 %v426, %v425
    %v441 = vpack.c.b16 %v428, %v427
    %v442 = vpack.c.b16 %v430, %v429
    %v443 = vpack.c.b16 %v432, %v431
    %v444 = vpack.c.b16 %v434, %v433
    %v445 = vpack.c.b16 %v436, %v435
    %v446 = vpack.c.b16 %v438, %v437
    %455 = vmatpush.bf16.msra.mxu0 %v446
    %456 = vmatpush.bf16.msra.mxu0 %v445
    %457 = vmatpush.bf16.msra.mxu0 %v444
    %458 = vmatpush.bf16.msra.mxu0 %v443
    %459 = vmatpush.bf16.msra.mxu0 %v442
    %460 = vmatpush.bf16.msra.mxu0 %v441
    %461 = vmatpush.bf16.msra.mxu0 %v440
    %462 = vmatpush.bf16.msra.mxu0 %v439
    %463 = vmatmul.bf16.gmra.mxu0 %v386
    %v464 = vpop.f32.mrf.mxu0
    %v465 = vadd.f32 %v405, %v464
    %v466 = vpop.f32.mrf.mxu0
    %v467 = vadd.f32 %v405, %v466
    %468 = vdwg.mxu0
    %v469 = vld [vmem:[#allocation5] sm:$0xff]
    %v470 = vpack.c.bf16 %v469, %v469
    %v471 = vld [vmem:[#allocation11] sm:$0xf]
    %v472 = vld [vmem:[#allocation11 + $0x4] sm:$0xf]
    %v473 = vld [vmem:[%s9] sm:$0x1]
    %v475 = vperm.slane %v473, 0
    %v479 = vunpack.c.l.b16 %v471
    %v480 = vunpack.c.l.b16 %v472
    %v481 = vpack.c.b16 %v480, %v479
    %vm483 = vcmask 130048
    %v485 = vsel %vm483, %v470, 0
    %487 = vmatpush.bf16.msra.mxu0 0
    %488 = vmatpush.bf16.msra.mxu0 0
    %489 = vmatpush.bf16.msra.mxu0 0
    %490 = vmatpush.bf16.msra.mxu0 0
    %491 = vmatpush.bf16.msra.mxu0 0
    %492 = vmatpush.bf16.msra.mxu0 0
    %493 = vmatpush.bf16.msra.mxu0 0
    %494 = vmatpush.bf16.msra.mxu0 %v481
    %495 = vmatmul.bf16.gmra.mxu0 %v485
    %v496 = vpop.f32.mrf.mxu0
    %v497 = vadd.f32 %v475, %v496
    %v498 = vpop.f32.mrf.mxu0
    %499 = vdwg.mxu0
    %v500 = vmax.f32 %v497, 0.0
    %v501 = vpack.c.bf16 %v500, %v500
    %v502 = vld [vmem:[#allocation13] sm:$0xf]
    %v503 = vld [vmem:[#allocation13 + $0x4] sm:$0xf]
    %v504 = vld [vmem:[#allocation13 + $0x8] sm:$0xf]
    %v505 = vld [vmem:[#allocation13 + $0xc] sm:$0xf]
    %v506 = vld [vmem:[#allocation13 + $0x10] sm:$0xf]
    %v507 = vld [vmem:[#allocation13 + $0x14] sm:$0xf]
    %v508 = vld [vmem:[#allocation13 + $0x18] sm:$0xf]
    %v509 = vld [vmem:[#allocation13 + $0x1c] sm:$0xf]
    %v510 = vld [vmem:[#allocation13 + $0x20] sm:$0xf]
    %v511 = vld [vmem:[#allocation13 + $0x24] sm:$0xf]
    %v512 = vld [vmem:[#allocation13 + $0x28] sm:$0xf]
    %v513 = vld [vmem:[#allocation13 + $0x2c] sm:$0xf]
    %v514 = vld [vmem:[#allocation13 + $0x30] sm:$0xf]
    %v515 = vld [vmem:[#allocation13 + $0x34] sm:$0xf]
    %v516 = vld [vmem:[#allocation13 + $0x38] sm:$0xf]
    %v517 = vld [vmem:[#allocation13 + $0x3c] sm:$0xf]
    %v518 = vld [vmem:[%s11] sm:$0x1]
    %v520 = vperm.slane %v518, 0
    %v538 = vunpack.c.l.b16 %v502
    %v539 = vunpack.c.l.b16 %v503
    %v540 = vunpack.c.l.b16 %v504
    %v541 = vunpack.c.l.b16 %v505
    %v542 = vunpack.c.l.b16 %v506
    %v543 = vunpack.c.l.b16 %v507
    %v544 = vunpack.c.l.b16 %v508
    %v545 = vunpack.c.l.b16 %v509
    %v546 = vunpack.c.l.b16 %v510
    %v547 = vunpack.c.l.b16 %v511
    %v548 = vunpack.c.l.b16 %v512
    %v549 = vunpack.c.l.b16 %v513
    %v550 = vunpack.c.l.b16 %v514
    %v551 = vunpack.c.l.b16 %v515
    %v552 = vunpack.c.l.b16 %v516
    %v553 = vunpack.c.l.b16 %v517
    %v554 = vpack.c.b16 %v539, %v538
    %v555 = vpack.c.b16 %v541, %v540
    %v556 = vpack.c.b16 %v543, %v542
    %v557 = vpack.c.b16 %v545, %v544
    %v558 = vpack.c.b16 %v547, %v546
    %v559 = vpack.c.b16 %v549, %v548
    %v560 = vpack.c.b16 %v551, %v550
    %v561 = vpack.c.b16 %v553, %v552
    %570 = vmatpush.bf16.msra.mxu0 %v561
    %571 = vmatpush.bf16.msra.mxu0 %v560
    %572 = vmatpush.bf16.msra.mxu0 %v559
    %573 = vmatpush.bf16.msra.mxu0 %v558
    %574 = vmatpush.bf16.msra.mxu0 %v557
    %575 = vmatpush.bf16.msra.mxu0 %v556
    %576 = vmatpush.bf16.msra.mxu0 %v555
    %577 = vmatpush.bf16.msra.mxu0 %v554
    %578 = vmatmul.bf16.gmra.mxu0 %v501
    %v579 = vpop.f32.mrf.mxu0
    %v580 = vadd.f32 %v520, %v579
    %v581 = vpop.f32.mrf.mxu0
    %582 = vdwg.mxu0
    %v583 = vmax.f32 %v580, 0.0
    %v584 = vpack.c.bf16 %v583, %v583
    %v585 = vld [vmem:[#allocation14] sm:$0xf]
    %v586 = vld [vmem:[#allocation14 + $0x4] sm:$0xf]
    %v587 = vld [vmem:[#allocation14 + $0x8] sm:$0xf]
    %v588 = vld [vmem:[#allocation14 + $0xc] sm:$0xf]
    %v589 = vld [vmem:[#allocation14 + $0x10] sm:$0xf]
    %v590 = vld [vmem:[#allocation14 + $0x14] sm:$0xf]
    %v591 = vld [vmem:[#allocation14 + $0x18] sm:$0xf]
    %v592 = vld [vmem:[#allocation14 + $0x1c] sm:$0xf]
    %v593 = vld [vmem:[#allocation14 + $0x20] sm:$0xf]
    %v594 = vld [vmem:[#allocation14 + $0x24] sm:$0xf]
    %v595 = vld [vmem:[#allocation14 + $0x28] sm:$0xf]
    %v596 = vld [vmem:[#allocation14 + $0x2c] sm:$0xf]
    %v597 = vld [vmem:[#allocation14 + $0x30] sm:$0xf]
    %v598 = vld [vmem:[#allocation14 + $0x34] sm:$0xf]
    %v599 = vld [vmem:[#allocation14 + $0x38] sm:$0xf]
    %v600 = vld [vmem:[#allocation14 + $0x3c] sm:$0xf]
    %v601 = vld [vmem:[%s13] sm:$0x1]
    %v603 = vperm.slane %v601, 0
    %v621 = vunpack.c.l.b16 %v585
    %v622 = vunpack.c.l.b16 %v586
    %v623 = vunpack.c.l.b16 %v587
    %v624 = vunpack.c.l.b16 %v588
    %v625 = vunpack.c.l.b16 %v589
    %v626 = vunpack.c.l.b16 %v590
    %v627 = vunpack.c.l.b16 %v591
    %v628 = vunpack.c.l.b16 %v592
    %v629 = vunpack.c.l.b16 %v593
    %v630 = vunpack.c.l.b16 %v594
    %v631 = vunpack.c.l.b16 %v595
    %v632 = vunpack.c.l.b16 %v596
    %v633 = vunpack.c.l.b16 %v597
    %v634 = vunpack.c.l.b16 %v598
    %v635 = vunpack.c.l.b16 %v599
    %v636 = vunpack.c.l.b16 %v600
    %v637 = vpack.c.b16 %v622, %v621
    %v638 = vpack.c.b16 %v624, %v623
    %v639 = vpack.c.b16 %v626, %v625
    %v640 = vpack.c.b16 %v628, %v627
    %v641 = vpack.c.b16 %v630, %v629
    %v642 = vpack.c.b16 %v632, %v631
    %v643 = vpack.c.b16 %v634, %v633
    %v644 = vpack.c.b16 %v636, %v635
    %653 = vmatpush.bf16.msra.mxu0 %v644
    %654 = vmatpush.bf16.msra.mxu0 %v643
    %655 = vmatpush.bf16.msra.mxu0 %v642
    %656 = vmatpush.bf16.msra.mxu0 %v641
    %657 = vmatpush.bf16.msra.mxu0 %v640
    %658 = vmatpush.bf16.msra.mxu0 %v639
    %659 = vmatpush.bf16.msra.mxu0 %v638
    %660 = vmatpush.bf16.msra.mxu0 %v637
    %661 = vmatmul.bf16.gmra.mxu0 %v584
    %v662 = vpop.f32.mrf.mxu0
    %v663 = vadd.f32 %v603, %v662
    %v664 = vpop.f32.mrf.mxu0
    %665 = vdwg.mxu0
    %666 = vst [vmem:[#allocation22] sm:$0xff] %v663
    %v667 = vpack.c.bf16 %v465, %v465
    %v668 = vld [vmem:[#allocation16] sm:$0xf]
    %v669 = vld [vmem:[#allocation16 + $0x4] sm:$0xf]
    %v670 = vld [vmem:[#allocation16 + $0x8] sm:$0xf]
    %v671 = vld [vmem:[#allocation16 + $0xc] sm:$0xf]
    %v672 = vld [vmem:[#allocation16 + $0x10] sm:$0xf]
    %v673 = vld [vmem:[#allocation16 + $0x14] sm:$0xf]
    %v674 = vld [vmem:[#allocation16 + $0x18] sm:$0xf]
    %v675 = vld [vmem:[#allocation16 + $0x1c] sm:$0xf]
    %v676 = vld [vmem:[#allocation16 + $0x20] sm:$0xf]
    %v677 = vld [vmem:[#allocation16 + $0x24] sm:$0xf]
    %v678 = vld [vmem:[#allocation16 + $0x28] sm:$0xf]
    %v679 = vld [vmem:[#allocation16 + $0x2c] sm:$0xf]
    %v680 = vld [vmem:[#allocation16 + $0x30] sm:$0xf]
    %v681 = vld [vmem:[#allocation16 + $0x34] sm:$0xf]
    %v682 = vld [vmem:[#allocation16 + $0x38] sm:$0xf]
    %v683 = vld [vmem:[#allocation16 + $0x3c] sm:$0xf]
    %v684 = vpack.c.bf16 %v467, %v467
    %v685 = vld [vmem:[#allocation17] sm:$0xf]
    %v686 = vld [vmem:[#allocation17 + $0x4] sm:$0xf]
    %v687 = vld [vmem:[#allocation17 + $0x8] sm:$0xf]
    %v688 = vld [vmem:[#allocation17 + $0xc] sm:$0xf]
    %v689 = vld [vmem:[#allocation17 + $0x10] sm:$0xf]
    %v690 = vld [vmem:[#allocation17 + $0x14] sm:$0xf]
    %v691 = vld [vmem:[#allocation17 + $0x18] sm:$0xf]
    %v692 = vld [vmem:[#allocation17 + $0x1c] sm:$0xf]
    %v693 = vld [vmem:[#allocation17 + $0x20] sm:$0xf]
    %v694 = vld [vmem:[#allocation17 + $0x24] sm:$0xf]
    %v695 = vld [vmem:[#allocation17 + $0x28] sm:$0xf]
    %v696 = vld [vmem:[#allocation17 + $0x2c] sm:$0xf]
    %v697 = vld [vmem:[#allocation17 + $0x30] sm:$0xf]
    %v698 = vld [vmem:[#allocation17 + $0x34] sm:$0xf]
    %v699 = vld [vmem:[#allocation17 + $0x38] sm:$0xf]
    %v700 = vld [vmem:[#allocation17 + $0x3c] sm:$0xf]
    %v717 = vunpack.c.l.b16 %v685
    %v718 = vunpack.c.l.b16 %v686
    %v719 = vunpack.c.l.b16 %v687
    %v720 = vunpack.c.l.b16 %v688
    %v721 = vunpack.c.l.b16 %v689
    %v722 = vunpack.c.l.b16 %v690
    %v723 = vunpack.c.l.b16 %v691
    %v724 = vunpack.c.l.b16 %v692
    %v725 = vunpack.c.l.b16 %v693
    %v726 = vunpack.c.l.b16 %v694
    %v727 = vunpack.c.l.b16 %v695
    %v728 = vunpack.c.l.b16 %v696
    %v729 = vunpack.c.l.b16 %v697
    %v730 = vunpack.c.l.b16 %v698
    %v731 = vunpack.c.l.b16 %v699
    %v732 = vunpack.c.l.b16 %v700
    %v733 = vpack.c.b16 %v718, %v717
    %v734 = vpack.c.b16 %v720, %v719
    %v735 = vpack.c.b16 %v722, %v721
    %v736 = vpack.c.b16 %v724, %v723
    %v737 = vpack.c.b16 %v726, %v725
    %v738 = vpack.c.b16 %v728, %v727
    %v739 = vpack.c.b16 %v730, %v729
    %v740 = vpack.c.b16 %v732, %v731
    %749 = vmatpush.bf16.msra.mxu0 %v740
    %750 = vmatpush.bf16.msra.mxu0 %v739
    %751 = vmatpush.bf16.msra.mxu0 %v738
    %752 = vmatpush.bf16.msra.mxu0 %v737
    %753 = vmatpush.bf16.msra.mxu0 %v736
    %754 = vmatpush.bf16.msra.mxu0 %v735
    %755 = vmatpush.bf16.msra.mxu0 %v734
    %756 = vmatpush.bf16.msra.mxu0 %v733
    %757 = vmatmul.bf16.gmra.mxu0 %v684
    %v758 = vpop.f32.mrf.mxu0
    %v759 = vadd.f32 0.0, %v758
    %v760 = vpop.f32.mrf.mxu0
    %761 = vdwg.mxu0
    %v778 = vunpack.c.l.b16 %v668
    %v779 = vunpack.c.l.b16 %v669
    %v780 = vunpack.c.l.b16 %v670
    %v781 = vunpack.c.l.b16 %v671
    %v782 = vunpack.c.l.b16 %v672
    %v783 = vunpack.c.l.b16 %v673
    %v784 = vunpack.c.l.b16 %v674
    %v785 = vunpack.c.l.b16 %v675
    %v786 = vunpack.c.l.b16 %v676
    %v787 = vunpack.c.l.b16 %v677
    %v788 = vunpack.c.l.b16 %v678
    %v789 = vunpack.c.l.b16 %v679
    %v790 = vunpack.c.l.b16 %v680
    %v791 = vunpack.c.l.b16 %v681
    %v792 = vunpack.c.l.b16 %v682
    %v793 = vunpack.c.l.b16 %v683
    %v794 = vpack.c.b16 %v779, %v778
    %v795 = vpack.c.b16 %v781, %v780
    %v796 = vpack.c.b16 %v783, %v782
    %v797 = vpack.c.b16 %v785, %v784
    %v798 = vpack.c.b16 %v787, %v786
    %v799 = vpack.c.b16 %v789, %v788
    %v800 = vpack.c.b16 %v791, %v790
    %v801 = vpack.c.b16 %v793, %v792
    %810 = vmatpush.bf16.msra.mxu0 %v801
    %811 = vmatpush.bf16.msra.mxu0 %v800
    %812 = vmatpush.bf16.msra.mxu0 %v799
    %813 = vmatpush.bf16.msra.mxu0 %v798
    %814 = vmatpush.bf16.msra.mxu0 %v797
    %815 = vmatpush.bf16.msra.mxu0 %v796
    %816 = vmatpush.bf16.msra.mxu0 %v795
    %817 = vmatpush.bf16.msra.mxu0 %v794
    %818 = vmatmul.bf16.gmra.mxu0 %v667
    %v819 = vpop.f32.mrf.mxu0
    %v820 = vadd.f32 %v759, %v819
    %v821 = vpop.f32.mrf.mxu0
    %822 = vdwg.mxu0
    %v823 = vld [vmem:[%s16] sm:$0x1]
    %v825 = vperm.slane %v823, 0
    %v827 = vadd.f32 %v820, %v825
    %v828 = vmax.f32 %v827, 0.0
    %v829 = vpack.c.bf16 %v828, %v828
    %v830 = vld [vmem:[#allocation19] sm:$0xf]
    %v831 = vld [vmem:[#allocation19 + $0x4] sm:$0xf]
    %v832 = vld [vmem:[#allocation19 + $0x8] sm:$0xf]
    %v833 = vld [vmem:[#allocation19 + $0xc] sm:$0xf]
    %v834 = vld [vmem:[#allocation19 + $0x10] sm:$0xf]
    %v835 = vld [vmem:[#allocation19 + $0x14] sm:$0xf]
    %v836 = vld [vmem:[#allocation19 + $0x18] sm:$0xf]
    %v837 = vld [vmem:[#allocation19 + $0x1c] sm:$0xf]
    %v838 = vld [vmem:[#allocation19 + $0x20] sm:$0xf]
    %v839 = vld [vmem:[#allocation19 + $0x24] sm:$0xf]
    %v840 = vld [vmem:[#allocation19 + $0x28] sm:$0xf]
    %v841 = vld [vmem:[#allocation19 + $0x2c] sm:$0xf]
    %v842 = vld [vmem:[#allocation19 + $0x30] sm:$0xf]
    %v843 = vld [vmem:[#allocation19 + $0x34] sm:$0xf]
    %v844 = vld [vmem:[#allocation19 + $0x38] sm:$0xf]
    %v845 = vld [vmem:[#allocation19 + $0x3c] sm:$0xf]
    %v846 = vld [vmem:[%s18] sm:$0x1]
    %v848 = vperm.slane %v846, 0
    %v866 = vunpack.c.l.b16 %v830
    %v867 = vunpack.c.l.b16 %v831
    %v868 = vunpack.c.l.b16 %v832
    %v869 = vunpack.c.l.b16 %v833
    %v870 = vunpack.c.l.b16 %v834
    %v871 = vunpack.c.l.b16 %v835
    %v872 = vunpack.c.l.b16 %v836
    %v873 = vunpack.c.l.b16 %v837
    %v874 = vunpack.c.l.b16 %v838
    %v875 = vunpack.c.l.b16 %v839
    %v876 = vunpack.c.l.b16 %v840
    %v877 = vunpack.c.l.b16 %v841
    %v878 = vunpack.c.l.b16 %v842
    %v879 = vunpack.c.l.b16 %v843
    %v880 = vunpack.c.l.b16 %v844
    %v881 = vunpack.c.l.b16 %v845
    %v882 = vpack.c.b16 %v867, %v866
    %v883 = vpack.c.b16 %v869, %v868
    %v884 = vpack.c.b16 %v871, %v870
    %v885 = vpack.c.b16 %v873, %v872
    %v886 = vpack.c.b16 %v875, %v874
    %v887 = vpack.c.b16 %v877, %v876
    %v888 = vpack.c.b16 %v879, %v878
    %v889 = vpack.c.b16 %v881, %v880
    %898 = vmatpush.bf16.msra.mxu0 %v889
    %899 = vmatpush.bf16.msra.mxu0 %v888
    %900 = vmatpush.bf16.msra.mxu0 %v887
    %901 = vmatpush.bf16.msra.mxu0 %v886
    %902 = vmatpush.bf16.msra.mxu0 %v885
    %903 = vmatpush.bf16.msra.mxu0 %v884
    %904 = vmatpush.bf16.msra.mxu0 %v883
    %905 = vmatpush.bf16.msra.mxu0 %v882
    %906 = vmatmul.bf16.gmra.mxu0 %v829
    %v907 = vpop.f32.mrf.mxu0
    %v908 = vadd.f32 %v848, %v907
    %v909 = vpop.f32.mrf.mxu0
    %910 = vdwg.mxu0
    %v911 = vmax.f32 %v908, 0.0
    %v912 = vpack.c.bf16 %v911, %v911
    %v913 = vld [vmem:[#allocation20] sm:$0xf]
    %v914 = vld [vmem:[#allocation20 + $0x4] sm:$0xf]
    %v915 = vld [vmem:[#allocation20 + $0x8] sm:$0xf]
    %v916 = vld [vmem:[#allocation20 + $0xc] sm:$0xf]
    %v917 = vld [vmem:[#allocation20 + $0x10] sm:$0xf]
    %v918 = vld [vmem:[#allocation20 + $0x14] sm:$0xf]
    %v919 = vld [vmem:[#allocation20 + $0x18] sm:$0xf]
    %v920 = vld [vmem:[#allocation20 + $0x1c] sm:$0xf]
    %v921 = vld [vmem:[#allocation20 + $0x20] sm:$0xf]
    %v922 = vld [vmem:[#allocation20 + $0x24] sm:$0xf]
    %v923 = vld [vmem:[#allocation20 + $0x28] sm:$0xf]
    %v924 = vld [vmem:[#allocation20 + $0x2c] sm:$0xf]
    %v925 = vld [vmem:[#allocation20 + $0x30] sm:$0xf]
    %v926 = vld [vmem:[#allocation20 + $0x34] sm:$0xf]
    %v927 = vld [vmem:[#allocation20 + $0x38] sm:$0xf]
    %v928 = vld [vmem:[#allocation20 + $0x3c] sm:$0xf]
    %v929 = vld [vmem:[%s20] sm:$0x1]
    %v931 = vperm.slane %v929, 0
    %v949 = vunpack.c.l.b16 %v913
    %v950 = vunpack.c.l.b16 %v914
    %v951 = vunpack.c.l.b16 %v915
    %v952 = vunpack.c.l.b16 %v916
    %v953 = vunpack.c.l.b16 %v917
    %v954 = vunpack.c.l.b16 %v918
    %v955 = vunpack.c.l.b16 %v919
    %v956 = vunpack.c.l.b16 %v920
    %v957 = vunpack.c.l.b16 %v921
    %v958 = vunpack.c.l.b16 %v922
    %v959 = vunpack.c.l.b16 %v923
    %v960 = vunpack.c.l.b16 %v924
    %v961 = vunpack.c.l.b16 %v925
    %v962 = vunpack.c.l.b16 %v926
    %v963 = vunpack.c.l.b16 %v927
    %v964 = vunpack.c.l.b16 %v928
    %v965 = vpack.c.b16 %v950, %v949
    %v966 = vpack.c.b16 %v952, %v951
    %v967 = vpack.c.b16 %v954, %v953
    %v968 = vpack.c.b16 %v956, %v955
    %v969 = vpack.c.b16 %v958, %v957
    %v970 = vpack.c.b16 %v960, %v959
    %v971 = vpack.c.b16 %v962, %v961
    %v972 = vpack.c.b16 %v964, %v963
    %981 = vmatpush.bf16.msra.mxu0 %v972
    %982 = vmatpush.bf16.msra.mxu0 %v971
    %983 = vmatpush.bf16.msra.mxu0 %v970
    %984 = vmatpush.bf16.msra.mxu0 %v969
    %985 = vmatpush.bf16.msra.mxu0 %v968
    %986 = vmatpush.bf16.msra.mxu0 %v967
    %987 = vmatpush.bf16.msra.mxu0 %v966
    %988 = vmatpush.bf16.msra.mxu0 %v965
    %989 = vmatmul.bf16.gmra.mxu0 %v912
    %v990 = vpop.f32.mrf.mxu0
    %v991 = vadd.f32 %v931, %v990
    %v992 = vpop.f32.mrf.mxu0
    %993 = vdwg.mxu0
    %994 = vst [vmem:[#allocation23] sm:$0xff] %v991
    // Predicated region
    $region134: #{tpu_custom_call.1} parent=1 // pred_check
      _
    $region135: #{tpu_custom_call.1} parent=1 // pred_check_branch
      %996 = sbr.rel (0) target = $region137
    $region136: #{tpu_custom_call.1} parent=1 // pred_region
      %998 = vsyncadd [#allocation4], 0
      %s1000 = sshll.u32 [#allocation22], 4
      %s1001 = int_to_ptr.vmem [resolvable:$true] %s1000
      %s1002 = sshll.u32 %s21, 4
      %s1003 = int_to_ptr.hbm [resolvable:$true] %s1002
      %1005 = dma.vmem_to_hbm [thread:$0]  %s1001, 128, %s1003, [#allocation4]
    $region137: #{tpu_custom_call.1} parent=1 // pred_fallthru
      _
    // Predicated region
    $region138: #{tpu_custom_call.1} parent=1 // pred_check
      _
    $region139: #{tpu_custom_call.1} parent=1 // pred_check_branch
      %1007 = sbr.rel (0) target = $region141
    $region140: #{tpu_custom_call.1} parent=1 // pred_region
      %1009 = vsyncadd [#allocation24], 0
      %s1011 = sshll.u32 [#allocation23], 4
      %s1012 = int_to_ptr.vmem [resolvable:$true] %s1011
      %s1013 = sshll.u32 %s22, 4
      %s1014 = int_to_ptr.hbm [resolvable:$true] %s1013
      %1016 = dma.vmem_to_hbm [thread:$0]  %s1012, 128, %s1014, [#allocation24]
    $region141: #{tpu_custom_call.1} parent=1 // pred_fallthru
      _
    // Predicated region
    $region142: #{tpu_custom_call.1} parent=1 // pred_check
      _
    $region143: #{tpu_custom_call.1} parent=1 // pred_check_branch
      %1018 = sbr.rel (0) target = $region145
    $region144: #{tpu_custom_call.1} parent=1 // pred_region
      %1020 = dma.done [#allocation4], 128
    $region145: #{tpu_custom_call.1} parent=1 // pred_fallthru
      _
    // Predicated region
    $region146: #{tpu_custom_call.1} parent=1 // pred_check
      _
    $region147: #{tpu_custom_call.1} parent=1 // pred_check_branch
      %1022 = sbr.rel (0) target = $region149
    $region148: #{tpu_custom_call.1} parent=1 // pred_region
      %1024 = dma.done [#allocation24], 128
    $region149: #{tpu_custom_call.1} parent=1 // pred_fallthru
      _
    %1025 = vsyncpa [#allocation3], 1
    %1026 = vsyncpa [#allocation6], 1
    %1027 = vsyncpa [#allocation9], 1
    %1028 = vsyncpa [#allocation12], 1
    %1029 = vsyncpa [#allocation15], 1
    %1030 = vsyncpa [#allocation18], 1
    %1031 = vsyncpa [#allocation21], 1
    %1032 = vsyncpa [#allocation4], 1
    %1033 = vsyncpa [#allocation24], 1

</llo_original>
